<compile_context>
chip_gen: v5e
topology: v5e:2x2
jax: 0.10.0
libtpu: 0.0.40
codegen_flags: <defaults>
</compile_context>

<pallas_src>
import jax
import jax.numpy as jnp
import numpy as np
from jax.experimental import pallas as pl
from jax.experimental.pallas import tpu as pltpu

DIMENSION = 5   # input dimension (number of species)
HIDDEN = 7      # hidden width of the FICNN
HP = 8          # hidden width padded to a sublane multiple
N_PROP = 4      # number of prop/lateral hidden blocks
N_SEG = N_PROP + 2  # fused lateral segments: input layer + 4 laterals + lateral_out
EPS = 1e-2      # stand-in for args.eps (unspecified in the original script)


def _softplus(z):
    # numerically stable softplus, matches torch.nn.Softplus semantics
    return jnp.logaddexp(z, 0.0)


def _reparam_negative(W):
    # NegativeLinear weight reparameterization (elementwise, layout-agnostic):
    #   W >= 0 -> -exp(-W - eps);  W < 0 -> W - exp(-eps)
    # Note: jnp.where evaluates both branches; -exp(-W-EPS) may overflow for very negative W
    # but that branch is discarded by the where, so it is benign.
    return jnp.where(W >= 0.0, -jnp.exp(-W - EPS), W - jnp.exp(-EPS))


def entropy_kernel(
    x_ref,       # (DIMENSION, TB)   x0, transposed: batch on lanes
    wlat_ref,    # (N_SEG*HP, DIMENSION)  fused [input | lateral1..4 | lateral_out] weights
    blat_ref,    # (N_SEG*HP, 1)          fused biases (prop+lateral biases folded together)
    wp_ref,      # (N_PROP, HP, HP)       already-reparameterized NegativeLinear weights, padded
    wout_ref,    # (1, HP)                already-reparameterized output weight, padded
    o_ref,       # (1, TB)                S(x0), lane-dense
):
    xT = x_ref[...]  # (D, TB)

    # One fused matmul for every x0-dependent term: (48, D) @ (D, TB) + (48, 1)
    lat = (
        jnp.dot(wlat_ref[...], xT, preferred_element_type=jnp.float32)
        + blat_ref[...]
    )  # (N_SEG*HP, TB)

    # x = -softplus(input_layer(x0))        (rows 0:8, 8-aligned slice)
    h = -_softplus(lat[0:HP])               # (HP, TB); padded row is inert downstream

    # four prop + lateral blocks:  x = -softplus(prop_l(x) + lateral_l(x0))
    for l in range(N_PROP):
        z = (
            jnp.dot(wp_ref[l], h, preferred_element_type=jnp.float32)
            + lat[HP * (l + 1): HP * (l + 2)]
        )
        h = -_softplus(z)

    # S_out = -softplus(output_layer(x) + lateral_layer_out(x0))
    s = -_softplus(
        jnp.dot(wout_ref[...], h, preferred_element_type=jnp.float32)
        + lat[HP * (N_PROP + 1): HP * (N_PROP + 1) + 1]
    )  # (1, TB)
    o_ref[...] = s.astype(o_ref.dtype)


def prepare_weights(params):
    """Hoisted, per-call preprocessing: reparameterize NegativeLinear weights, fuse all
    x0-side weights/biases into one (48, D) matrix, and pad hidden width 7 -> 8."""
    (w_in, b_in, wp, bp, wl, bl, w_out, b_out, w_lout, b_lout) = params

    wp_neg = _reparam_negative(wp)          # (N_PROP, 7, 7), (out, in) layout
    w_out_neg = _reparam_negative(w_out)    # (1, 7)

    wlat = jnp.zeros((N_SEG * HP, DIMENSION), jnp.float32)
    blat = jnp.zeros((N_SEG * HP, 1), jnp.float32)

    # segment 0: input layer
    wlat = wlat.at[0:HIDDEN].set(w_in)
    blat = blat.at[0:HIDDEN, 0].set(b_in)
    # segments 1..4: lateral layers (prop bias folded into the lateral bias)
    for l in range(N_PROP):
        r = HP * (l + 1)
        wlat = wlat.at[r:r + HIDDEN].set(wl[l])
        blat = blat.at[r:r + HIDDEN, 0].set(bp[l] + bl[l])
    # segment 5: lateral_layer_out (output-layer bias folded in)
    r = HP * (N_PROP + 1)
    wlat = wlat.at[r:r + 1].set(w_lout)
    blat = blat.at[r, 0].set(b_out[0] + b_lout[0])

    wp8 = jnp.zeros((N_PROP, HP, HP), jnp.float32).at[:, :HIDDEN, :HIDDEN].set(wp_neg)
    wout8 = jnp.zeros((1, HP), jnp.float32).at[:, :HIDDEN].set(w_out_neg)
    return wlat, blat, wp8, wout8


def gradient_dynamics_forward(x, params, *, tile_b=1024):
    """Forward pass of GradientDynamics (== EntropyNetwork forward).

    x: (B, DIMENSION) float32; any B (padded internally).  Returns (B, 1).
    """
    B, D = x.shape
    assert D == DIMENSION

    tile_b = max(128, int(tile_b))          # keep lane axis a multiple of 128
    num_tiles = -(-B // tile_b)             # ceil-div: arbitrary batch sizes supported
    B_pad = num_tiles * tile_b

    wlat, blat, wp8, wout8 = prepare_weights(params)

    x_pad = x if B_pad == B else jnp.pad(x, ((0, B_pad - B), (0, 0)))
    xT = x_pad.astype(jnp.float32).T        # (D, B_pad): batch on the lane axis

    out = pl.pallas_call(
        entropy_kernel,
        out_shape=jax.ShapeDtypeStruct((1, B_pad), jnp.float32),
        grid_spec=pltpu.PrefetchScalarGridSpec(
            num_scalar_prefetch=0,
            grid=(num_tiles,),
            in_specs=[
                pl.BlockSpec((DIMENSION, tile_b), lambda i: (0, i)),
                pl.BlockSpec(wlat.shape, lambda i: (0, 0)),
                pl.BlockSpec(blat.shape, lambda i: (0, 0)),
                pl.BlockSpec(wp8.shape, lambda i: (0, 0, 0)),
                pl.BlockSpec(wout8.shape, lambda i: (0, 0)),
            ],
            out_specs=pl.BlockSpec((1, tile_b), lambda i: (0, i)),
        ),
        compiler_params=pltpu.CompilerParams(
            dimension_semantics=("parallel",),   # shards grid steps across v7x's 2 TCs
        ),
    )(xT, wlat, blat, wp8, wout8)

    # lane-dense (1, B_pad) slab -> (B, 1) to match the PyTorch module's output shape
    return out[0, :B].reshape(B, 1)


def init_params(key):
    """Deterministic parameter init mirroring EntropyNetwork._initialize_weights:
    kaiming_normal_ on every (Negative)Linear weight (PyTorch (out, in) layout), zeros on biases."""
    def kaiming(key, fan_out, fan_in):
        std = np.sqrt(2.0 / fan_in)  # kaiming_normal_, fan_in mode, gain sqrt(2)
        return std * jax.random.normal(key, (fan_out, fan_in), dtype=jnp.float32)

    keys = jax.random.split(key, 2 + 2 * N_PROP + 2)
    k = iter(keys)

    w_in = kaiming(next(k), HIDDEN, DIMENSION)                                   # (7, 5)
    b_in = jnp.zeros((HIDDEN,), jnp.float32)

    wp = jnp.stack([kaiming(next(k), HIDDEN, HIDDEN) for _ in range(N_PROP)])    # (4, 7, 7)
    bp = jnp.zeros((N_PROP, HIDDEN), jnp.float32)
    wl = jnp.stack([kaiming(next(k), HIDDEN, DIMENSION) for _ in range(N_PROP)]) # (4, 7, 5)
    bl = jnp.zeros((N_PROP, HIDDEN), jnp.float32)

    w_out = kaiming(next(k), 1, HIDDEN)                                          # (1, 7)
    b_out = jnp.zeros((1,), jnp.float32)
    w_lout = kaiming(next(k), 1, DIMENSION)                                      # (1, 5)
    b_lout = jnp.zeros((1,), jnp.float32)

    return (w_in, b_in, wp, bp, wl, bl, w_out, b_out, w_lout, b_lout)


def reference_forward(x, params):
    """Pure-JAX reference of EntropyNetwork.forward (PyTorch (out,in) weight layout)."""
    (w_in, b_in, wp, bp, wl, bl, w_out, b_out, w_lout, b_lout) = params
    x0 = x
    h = -_softplus(x0 @ w_in.T + b_in)
    for l in range(N_PROP):
        h = -_softplus(h @ _reparam_negative(wp[l]).T + bp[l] + x0 @ wl[l].T + bl[l])
    return -_softplus(h @ _reparam_negative(w_out).T + b_out + x0 @ w_lout.T + b_lout)


if __name__ == "__main__":
    key = jax.random.PRNGKey(0)
    k_param, k_x = jax.random.split(key)

    params = init_params(k_param)

    # B not a multiple of tile_b: exercises the padded tail, and with tile_b=512 gives a
    # 2-step parallel grid so both TensorCores on a v7x chip get work.
    B = 1000
    # concentrations-like positive inputs
    x = jnp.abs(jax.random.normal(k_x, (B, DIMENSION), dtype=jnp.float32)) + 0.1

    out = gradient_dynamics_forward(x, params, tile_b=512)
    out = jax.block_until_ready(out)

    ref = reference_forward(x, params)
    np.testing.assert_allclose(np.asarray(out), np.asarray(ref), rtol=1e-5, atol=1e-5)

    # TODO(synk): `predict` (autograd of S wrt x + dissipation + second grad) is a
    # differentiation-driven path, not implemented as a forward Pallas kernel here.
    print("KERNEL_OK")
</pallas_src>

<mosaic_0001>
module attributes {stable_mosaic.version = 11 : i64} {
  func.func @entropy_kernel(%arg0: i32, %arg1: memref<5x512xf32, #tpu.memory_space<vmem>>, %arg2: memref<48x5xf32, #tpu.memory_space<vmem>>, %arg3: memref<48x1xf32, #tpu.memory_space<vmem>>, %arg4: memref<4x8x8xf32, #tpu.memory_space<vmem>>, %arg5: memref<1x8xf32, #tpu.memory_space<vmem>>, %arg6: memref<1x512xf32, #tpu.memory_space<vmem>>) attributes {dimension_semantics = [#tpu.dimension_semantics<parallel>], iteration_bounds = array<i64: 2>, scalar_prefetch = 0 : i64, scratch_operands = 0 : i64, tpu.core_type = #tpu.core_type<tc>, window_params = [{transform_indices = @transform_0, window_bounds = array<i64: 5, 512>}, {pipeline_mode = #tpu.pipeline_mode<synchronous>, transform_indices = @transform_1, window_bounds = array<i64: 48, 5>}, {pipeline_mode = #tpu.pipeline_mode<synchronous>, transform_indices = @transform_2, window_bounds = array<i64: 48, 1>}, {pipeline_mode = #tpu.pipeline_mode<synchronous>, transform_indices = @transform_3, window_bounds = array<i64: 4, 8, 8>}, {pipeline_mode = #tpu.pipeline_mode<synchronous>, transform_indices = @transform_4, window_bounds = array<i64: 1, 8>}, {transform_indices = @transform_5, window_bounds = array<i64: 1, 512>}]} {
    %c0 = arith.constant 0 : index
    %c0_0 = arith.constant 0 : index
    %0 = vector.load %arg1[%c0, %c0_0] : memref<5x512xf32, #tpu.memory_space<vmem>>, vector<5x512xf32>
    %c0_1 = arith.constant 0 : index
    %c0_2 = arith.constant 0 : index
    %1 = vector.load %arg2[%c0_1, %c0_2] : memref<48x5xf32, #tpu.memory_space<vmem>>, vector<48x5xf32>
    %cst = arith.constant dense<0.000000e+00> : vector<48x512xf32>
    %2 = tpu.matmul %1, %0, %cst {dimension_numbers = #tpu.dot_dimension_numbers<[1], [0], [0], [1], [0, 0, 1, 1], [], []>} : vector<48x5xf32>, vector<5x512xf32>, vector<48x512xf32> -> vector<48x512xf32>
    %c0_3 = arith.constant 0 : index
    %c0_4 = arith.constant 0 : index
    %3 = vector.load %arg3[%c0_3, %c0_4] : memref<48x1xf32, #tpu.memory_space<vmem>>, vector<48x1xf32>
    %4 = vector.broadcast %3 : vector<48x1xf32> to vector<48x512xf32>
    %5 = arith.addf %2, %4 : vector<48x512xf32>
    %6 = vector.extract_strided_slice %5 {offsets = [0, 0], sizes = [8, 512], strides = [1, 1]} : vector<48x512xf32> to vector<8x512xf32>
    %cst_5 = arith.constant 0.000000e+00 : f32
    %7 = vector.broadcast %cst_5 : f32 to vector<8x512xf32>
    %8 = arith.maximumf %6, %7 : vector<8x512xf32>
    %9 = vector.broadcast %cst_5 : f32 to vector<8x512xf32>
    %10 = arith.subf %6, %9 : vector<8x512xf32>
    %11 = arith.cmpf one, %10, %10 : vector<8x512xf32>
    %12 = vector.broadcast %cst_5 : f32 to vector<8x512xf32>
    %13 = arith.addf %6, %12 : vector<8x512xf32>
    %14 = math.absf %10 : vector<8x512xf32>
    %cst_6 = arith.constant 0.000000e+00 : f32
    %15 = vector.broadcast %cst_6 : f32 to vector<8x512xf32>
    %16 = arith.subf %15, %14 : vector<8x512xf32>
    %17 = math.exp %16 : vector<8x512xf32>
    %18 = math.log1p %17 : vector<8x512xf32>
    %19 = arith.addf %8, %18 : vector<8x512xf32>
    %20 = arith.select %11, %13, %19 : vector<8x512xi1>, vector<8x512xf32>
    %cst_7 = arith.constant 0.000000e+00 : f32
    %21 = vector.broadcast %cst_7 : f32 to vector<8x512xf32>
    %22 = arith.subf %21, %20 : vector<8x512xf32>
    %c0_8 = arith.constant 0 : index
    %c0_9 = arith.constant 0 : index
    %c0_10 = arith.constant 0 : index
    %23 = vector.load %arg4[%c0_8, %c0_9, %c0_10] : memref<4x8x8xf32, #tpu.memory_space<vmem>>, vector<1x8x8xf32>
    %24 = vector.shape_cast %23 : vector<1x8x8xf32> to vector<8x8xf32>
    %cst_11 = arith.constant dense<0.000000e+00> : vector<8x512xf32>
    %25 = tpu.matmul %24, %22, %cst_11 {dimension_numbers = #tpu.dot_dimension_numbers<[1], [0], [0], [1], [0, 0, 1, 1], [], []>} : vector<8x8xf32>, vector<8x512xf32>, vector<8x512xf32> -> vector<8x512xf32>
    %26 = vector.extract_strided_slice %5 {offsets = [8, 0], sizes = [8, 512], strides = [1, 1]} : vector<48x512xf32> to vector<8x512xf32>
    %27 = arith.addf %25, %26 : vector<8x512xf32>
    %cst_12 = arith.constant 0.000000e+00 : f32
    %28 = vector.broadcast %cst_12 : f32 to vector<8x512xf32>
    %29 = arith.maximumf %27, %28 : vector<8x512xf32>
    %30 = vector.broadcast %cst_12 : f32 to vector<8x512xf32>
    %31 = arith.subf %27, %30 : vector<8x512xf32>
    %32 = arith.cmpf one, %31, %31 : vector<8x512xf32>
    %33 = vector.broadcast %cst_12 : f32 to vector<8x512xf32>
    %34 = arith.addf %27, %33 : vector<8x512xf32>
    %35 = math.absf %31 : vector<8x512xf32>
    %cst_13 = arith.constant 0.000000e+00 : f32
    %36 = vector.broadcast %cst_13 : f32 to vector<8x512xf32>
    %37 = arith.subf %36, %35 : vector<8x512xf32>
    %38 = math.exp %37 : vector<8x512xf32>
    %39 = math.log1p %38 : vector<8x512xf32>
    %40 = arith.addf %29, %39 : vector<8x512xf32>
    %41 = arith.select %32, %34, %40 : vector<8x512xi1>, vector<8x512xf32>
    %cst_14 = arith.constant 0.000000e+00 : f32
    %42 = vector.broadcast %cst_14 : f32 to vector<8x512xf32>
    %43 = arith.subf %42, %41 : vector<8x512xf32>
    %c1 = arith.constant 1 : index
    %c0_15 = arith.constant 0 : index
    %c0_16 = arith.constant 0 : index
    %44 = vector.load %arg4[%c1, %c0_15, %c0_16] : memref<4x8x8xf32, #tpu.memory_space<vmem>>, vector<1x8x8xf32>
    %45 = vector.shape_cast %44 : vector<1x8x8xf32> to vector<8x8xf32>
    %cst_17 = arith.constant dense<0.000000e+00> : vector<8x512xf32>
    %46 = tpu.matmul %45, %43, %cst_17 {dimension_numbers = #tpu.dot_dimension_numbers<[1], [0], [0], [1], [0, 0, 1, 1], [], []>} : vector<8x8xf32>, vector<8x512xf32>, vector<8x512xf32> -> vector<8x512xf32>
    %47 = vector.extract_strided_slice %5 {offsets = [16, 0], sizes = [8, 512], strides = [1, 1]} : vector<48x512xf32> to vector<8x512xf32>
    %48 = arith.addf %46, %47 : vector<8x512xf32>
    %cst_18 = arith.constant 0.000000e+00 : f32
    %49 = vector.broadcast %cst_18 : f32 to vector<8x512xf32>
    %50 = arith.maximumf %48, %49 : vector<8x512xf32>
    %51 = vector.broadcast %cst_18 : f32 to vector<8x512xf32>
    %52 = arith.subf %48, %51 : vector<8x512xf32>
    %53 = arith.cmpf one, %52, %52 : vector<8x512xf32>
    %54 = vector.broadcast %cst_18 : f32 to vector<8x512xf32>
    %55 = arith.addf %48, %54 : vector<8x512xf32>
    %56 = math.absf %52 : vector<8x512xf32>
    %cst_19 = arith.constant 0.000000e+00 : f32
    %57 = vector.broadcast %cst_19 : f32 to vector<8x512xf32>
    %58 = arith.subf %57, %56 : vector<8x512xf32>
    %59 = math.exp %58 : vector<8x512xf32>
    %60 = math.log1p %59 : vector<8x512xf32>
    %61 = arith.addf %50, %60 : vector<8x512xf32>
    %62 = arith.select %53, %55, %61 : vector<8x512xi1>, vector<8x512xf32>
    %cst_20 = arith.constant 0.000000e+00 : f32
    %63 = vector.broadcast %cst_20 : f32 to vector<8x512xf32>
    %64 = arith.subf %63, %62 : vector<8x512xf32>
    %c2 = arith.constant 2 : index
    %c0_21 = arith.constant 0 : index
    %c0_22 = arith.constant 0 : index
    %65 = vector.load %arg4[%c2, %c0_21, %c0_22] : memref<4x8x8xf32, #tpu.memory_space<vmem>>, vector<1x8x8xf32>
    %66 = vector.shape_cast %65 : vector<1x8x8xf32> to vector<8x8xf32>
    %cst_23 = arith.constant dense<0.000000e+00> : vector<8x512xf32>
    %67 = tpu.matmul %66, %64, %cst_23 {dimension_numbers = #tpu.dot_dimension_numbers<[1], [0], [0], [1], [0, 0, 1, 1], [], []>} : vector<8x8xf32>, vector<8x512xf32>, vector<8x512xf32> -> vector<8x512xf32>
    %68 = vector.extract_strided_slice %5 {offsets = [24, 0], sizes = [8, 512], strides = [1, 1]} : vector<48x512xf32> to vector<8x512xf32>
    %69 = arith.addf %67, %68 : vector<8x512xf32>
    %cst_24 = arith.constant 0.000000e+00 : f32
    %70 = vector.broadcast %cst_24 : f32 to vector<8x512xf32>
    %71 = arith.maximumf %69, %70 : vector<8x512xf32>
    %72 = vector.broadcast %cst_24 : f32 to vector<8x512xf32>
    %73 = arith.subf %69, %72 : vector<8x512xf32>
    %74 = arith.cmpf one, %73, %73 : vector<8x512xf32>
    %75 = vector.broadcast %cst_24 : f32 to vector<8x512xf32>
    %76 = arith.addf %69, %75 : vector<8x512xf32>
    %77 = math.absf %73 : vector<8x512xf32>
    %cst_25 = arith.constant 0.000000e+00 : f32
    %78 = vector.broadcast %cst_25 : f32 to vector<8x512xf32>
    %79 = arith.subf %78, %77 : vector<8x512xf32>
    %80 = math.exp %79 : vector<8x512xf32>
    %81 = math.log1p %80 : vector<8x512xf32>
    %82 = arith.addf %71, %81 : vector<8x512xf32>
    %83 = arith.select %74, %76, %82 : vector<8x512xi1>, vector<8x512xf32>
    %cst_26 = arith.constant 0.000000e+00 : f32
    %84 = vector.broadcast %cst_26 : f32 to vector<8x512xf32>
    %85 = arith.subf %84, %83 : vector<8x512xf32>
    %c3 = arith.constant 3 : index
    %c0_27 = arith.constant 0 : index
    %c0_28 = arith.constant 0 : index
    %86 = vector.load %arg4[%c3, %c0_27, %c0_28] : memref<4x8x8xf32, #tpu.memory_space<vmem>>, vector<1x8x8xf32>
    %87 = vector.shape_cast %86 : vector<1x8x8xf32> to vector<8x8xf32>
    %cst_29 = arith.constant dense<0.000000e+00> : vector<8x512xf32>
    %88 = tpu.matmul %87, %85, %cst_29 {dimension_numbers = #tpu.dot_dimension_numbers<[1], [0], [0], [1], [0, 0, 1, 1], [], []>} : vector<8x8xf32>, vector<8x512xf32>, vector<8x512xf32> -> vector<8x512xf32>
    %89 = vector.extract_strided_slice %5 {offsets = [32, 0], sizes = [8, 512], strides = [1, 1]} : vector<48x512xf32> to vector<8x512xf32>
    %90 = arith.addf %88, %89 : vector<8x512xf32>
    %cst_30 = arith.constant 0.000000e+00 : f32
    %91 = vector.broadcast %cst_30 : f32 to vector<8x512xf32>
    %92 = arith.maximumf %90, %91 : vector<8x512xf32>
    %93 = vector.broadcast %cst_30 : f32 to vector<8x512xf32>
    %94 = arith.subf %90, %93 : vector<8x512xf32>
    %95 = arith.cmpf one, %94, %94 : vector<8x512xf32>
    %96 = vector.broadcast %cst_30 : f32 to vector<8x512xf32>
    %97 = arith.addf %90, %96 : vector<8x512xf32>
    %98 = math.absf %94 : vector<8x512xf32>
    %cst_31 = arith.constant 0.000000e+00 : f32
    %99 = vector.broadcast %cst_31 : f32 to vector<8x512xf32>
    %100 = arith.subf %99, %98 : vector<8x512xf32>
    %101 = math.exp %100 : vector<8x512xf32>
    %102 = math.log1p %101 : vector<8x512xf32>
    %103 = arith.addf %92, %102 : vector<8x512xf32>
    %104 = arith.select %95, %97, %103 : vector<8x512xi1>, vector<8x512xf32>
    %cst_32 = arith.constant 0.000000e+00 : f32
    %105 = vector.broadcast %cst_32 : f32 to vector<8x512xf32>
    %106 = arith.subf %105, %104 : vector<8x512xf32>
    %c0_33 = arith.constant 0 : index
    %c0_34 = arith.constant 0 : index
    %107 = vector.load %arg5[%c0_33, %c0_34] : memref<1x8xf32, #tpu.memory_space<vmem>>, vector<1x8xf32>
    %cst_35 = arith.constant dense<0.000000e+00> : vector<1x512xf32>
    %108 = tpu.matmul %107, %106, %cst_35 {dimension_numbers = #tpu.dot_dimension_numbers<[1], [0], [0], [1], [0, 0, 1, 1], [], []>} : vector<1x8xf32>, vector<8x512xf32>, vector<1x512xf32> -> vector<1x512xf32>
    %109 = vector.extract_strided_slice %5 {offsets = [40, 0], sizes = [1, 512], strides = [1, 1]} : vector<48x512xf32> to vector<1x512xf32>
    %110 = arith.addf %108, %109 : vector<1x512xf32>
    %cst_36 = arith.constant 0.000000e+00 : f32
    %111 = vector.broadcast %cst_36 : f32 to vector<1x512xf32>
    %112 = arith.maximumf %110, %111 : vector<1x512xf32>
    %113 = vector.broadcast %cst_36 : f32 to vector<1x512xf32>
    %114 = arith.subf %110, %113 : vector<1x512xf32>
    %115 = arith.cmpf one, %114, %114 : vector<1x512xf32>
    %116 = vector.broadcast %cst_36 : f32 to vector<1x512xf32>
    %117 = arith.addf %110, %116 : vector<1x512xf32>
    %118 = math.absf %114 : vector<1x512xf32>
    %cst_37 = arith.constant 0.000000e+00 : f32
    %119 = vector.broadcast %cst_37 : f32 to vector<1x512xf32>
    %120 = arith.subf %119, %118 : vector<1x512xf32>
    %121 = math.exp %120 : vector<1x512xf32>
    %122 = math.log1p %121 : vector<1x512xf32>
    %123 = arith.addf %112, %122 : vector<1x512xf32>
    %124 = arith.select %115, %117, %123 : vector<1x512xi1>, vector<1x512xf32>
    %cst_38 = arith.constant 0.000000e+00 : f32
    %125 = vector.broadcast %cst_38 : f32 to vector<1x512xf32>
    %126 = arith.subf %125, %124 : vector<1x512xf32>
    %c0_39 = arith.constant 0 : index
    %c0_40 = arith.constant 0 : index
    %127 = vector.load %arg6[%c0_39, %c0_40] : memref<1x512xf32, #tpu.memory_space<vmem>>, vector<1x512xf32>
    tpu.vector_store %arg6[%c0_39, %c0_40], %126 {strides = array<i32>} : memref<1x512xf32, #tpu.memory_space<vmem>>, vector<1x512xf32>,
    return
  }
  func.func @transform_0(%arg0: i32) -> (i32, i32) {
    %c0_i32 = arith.constant 0 : i32
    %c0_i32_0 = arith.constant 0 : i32
    return %c0_i32, %arg0 : i32, i32
  }
  func.func @transform_1(%arg0: i32) -> (i32, i32) {
    %c0_i32 = arith.constant 0 : i32
    %c0_i32_0 = arith.constant 0 : i32
    %c0_i32_1 = arith.constant 0 : i32
    return %c0_i32, %c0_i32_0 : i32, i32
  }
  func.func @transform_2(%arg0: i32) -> (i32, i32) {
    %c0_i32 = arith.constant 0 : i32
    %c0_i32_0 = arith.constant 0 : i32
    %c0_i32_1 = arith.constant 0 : i32
    return %c0_i32, %c0_i32_0 : i32, i32
  }
  func.func @transform_3(%arg0: i32) -> (i32, i32, i32) {
    %c0_i32 = arith.constant 0 : i32
    %c0_i32_0 = arith.constant 0 : i32
    %c0_i32_1 = arith.constant 0 : i32
    %c0_i32_2 = arith.constant 0 : i32
    return %c0_i32, %c0_i32_0, %c0_i32_1 : i32, i32, i32
  }
  func.func @transform_4(%arg0: i32) -> (i32, i32) {
    %c0_i32 = arith.constant 0 : i32
    %c0_i32_0 = arith.constant 0 : i32
    %c0_i32_1 = arith.constant 0 : i32
    return %c0_i32, %c0_i32_0 : i32, i32
  }
  func.func @transform_5(%arg0: i32) -> (i32, i32) {
    %c0_i32 = arith.constant 0 : i32
    %c0_i32_0 = arith.constant 0 : i32
    return %c0_i32, %arg0 : i32, i32
  }
}

</mosaic_0001>

<llo_original>
// kernel: tpu_custom_call.1
$region0: #{tpu_custom_call.1}
  #allocation0 [shape = 'u32[]', space=smem, size = 0x4, offset = 0x4, fixed_abs, tag = 'smem constant byte address 0x4 - core index']
  #allocation1 [shape = 'u32[72,128]{1,0:T(1,128)}', space=vmem, size = 0x9000, scoped, tag = 'internal scratch']
  %s0 = inlined_call_operand.vmem [shape: f32[5,1024], index: 0, kind: input, shape index: {}]
  %s1 = inlined_call_operand.vmem [shape: f32[48,5], index: 1, kind: input, shape index: {}]
  %s2 = inlined_call_operand.vmem [shape: f32[48,1], index: 2, kind: input, shape index: {}]
  %s3 = inlined_call_operand.vmem [shape: f32[4,8,8], index: 3, kind: input, shape index: {}]
  %s4 = inlined_call_operand.vmem [shape: f32[1,8], index: 4, kind: input, shape index: {}]
  %s5 = inlined_call_operand.hbm [shape: f32[1,1024], index: 5, kind: output, shape index: {}]
  %s6 = sld [smem:[#allocation0]]
  $region53: #{tpu_custom_call.1} parent=0
    _
  %s8 = ssub.s32 1, %s6
  %s9 = scalar_select 0, %s8, %s6
  $region1: #{tpu_custom_call.1} parent=0
    #allocation2 [shape = 'u8[4096]{0}', space=vmem, size = 0x1000, scoped, tag = 'output window, operand 0']
    #allocation3 [shape = 's32[2]{0}', space=sflag, size = 0x8, scoped, tag = 'scoped memory for tpu_custom_call.1']
    %10 = vsyncpa [#allocation3], 0
    %s11 = scalar_lea.sflag [#allocation3], 1
    %12 = vsyncpa %s11, 0
    loop: start=0, step=1, limit=4
    $region2: #{tpu_custom_call.1} parent=1 // loop_pre_header
      _
    $region3: #{tpu_custom_call.1} parent=1 // loop_header
      %s14 = sphi 0, %s18
      %p15 = scmp.ge.s32.totalorder %s14, 4
      %s24 = sphi 0, %s26
      %s27 = sphi 0, %s24
      %s28 = sphi 0, %s27
      %s44 = sphi 0, %s28
      %s48 = sphi 0, %s48
      %s50 = sphi 0, %s48
      %s51 = sphi 0, %s50
      %s65 = sphi 0, %s51
      %s69 = sphi 0, %s69
      %s71 = sphi 0, %s69
      %s72 = sphi 0, %s71
      %s86 = sphi 0, %s72
      %s90 = sphi 0, %s90
      %s92 = sphi 0, %s90
      %s93 = sphi 0, %s92
      %s107 = sphi 0, %s93
      %s111 = sphi 0, %s111
      %s113 = sphi 0, %s111
      %s114 = sphi 0, %s113
      %s128 = sphi 0, %s114
      %s134 = sphi 0, %s136
      %s137 = sphi 0, %s134
      %s138 = sphi 0, %s137
      %s154 = sphi 0, %s138
    $region4: #{tpu_custom_call.1} parent=1 // loop_header_branch
      %17 = sbr.rel (%p15) target = $region8
    $region5: #{tpu_custom_call.1} parent=1 // loop_body
      %s19 = ssub.s32 %s14, 1
      %s20 = ssub.s32 %s14, 2
      %s21 = sadd.s32 %s14, 1
      %s22 = ssub.s32 %s14, %s21
      %p23 = scmp.eq.s32.totalorder %s22, 0
      %s25 = sadd.s32 %s24, 1
      %s26 = scalar_select %p23, %s24, %s25
      %p29 = pneg %p23
      %p30 = scmp.eq.s32.totalorder %s14, 1
      %p31 = por %p29, %p30
      %p32 = scmp.ne.s32.totalorder %s24, %s27
      %p33 = scmp.eq.s32.totalorder %s14, 0
      %p34 = por %p32, %p33
      %p35 = scmp.ne.s32.totalorder %s24, %s27
      %p36 = scmp.eq.s32.totalorder %s19, 1
      %p37 = por %p35, %p36
      %p38 = scmp.ne.s32.totalorder %s27, %s28
      %p39 = scmp.eq.s32.totalorder %s19, 0
      %p40 = por %p38, %p39
      %p41 = scmp.ne.s32.totalorder %s27, %s28
      %p42 = scmp.eq.s32.totalorder %s20, 1
      %p43 = por %p41, %p42
      %p45 = scmp.ne.s32.totalorder %s28, %s44
      %p46 = scmp.eq.s32.totalorder %s20, 0
      %p47 = por %p45, %p46
      %s49 = sadd.s32 %s48, 1
      %p52 = scmp.eq.s32.totalorder %s14, 1
      %p53 = scmp.ne.s32.totalorder %s48, %s50
      %p54 = scmp.eq.s32.totalorder %s14, 0
      %p55 = por %p53, %p54
      %p56 = scmp.ne.s32.totalorder %s48, %s50
      %p57 = scmp.eq.s32.totalorder %s19, 1
      %p58 = por %p56, %p57
      %p59 = scmp.ne.s32.totalorder %s50, %s51
      %p60 = scmp.eq.s32.totalorder %s19, 0
      %p61 = por %p59, %p60
      %p62 = scmp.ne.s32.totalorder %s50, %s51
      %p63 = scmp.eq.s32.totalorder %s20, 1
      %p64 = por %p62, %p63
      %p66 = scmp.ne.s32.totalorder %s51, %s65
      %p67 = scmp.eq.s32.totalorder %s20, 0
      %p68 = por %p66, %p67
      %s70 = sadd.s32 %s69, 1
      %p73 = scmp.eq.s32.totalorder %s14, 1
      %p74 = scmp.ne.s32.totalorder %s69, %s71
      %p75 = scmp.eq.s32.totalorder %s14, 0
      %p76 = por %p74, %p75
      %p77 = scmp.ne.s32.totalorder %s69, %s71
      %p78 = scmp.eq.s32.totalorder %s19, 1
      %p79 = por %p77, %p78
      %p80 = scmp.ne.s32.totalorder %s71, %s72
      %p81 = scmp.eq.s32.totalorder %s19, 0
      %p82 = por %p80, %p81
      %p83 = scmp.ne.s32.totalorder %s71, %s72
      %p84 = scmp.eq.s32.totalorder %s20, 1
      %p85 = por %p83, %p84
      %p87 = scmp.ne.s32.totalorder %s72, %s86
      %p88 = scmp.eq.s32.totalorder %s20, 0
      %p89 = por %p87, %p88
      %s91 = sadd.s32 %s90, 1
      %p94 = scmp.eq.s32.totalorder %s14, 1
      %p95 = scmp.ne.s32.totalorder %s90, %s92
      %p96 = scmp.eq.s32.totalorder %s14, 0
      %p97 = por %p95, %p96
      %p98 = scmp.ne.s32.totalorder %s90, %s92
      %p99 = scmp.eq.s32.totalorder %s19, 1
      %p100 = por %p98, %p99
      %p101 = scmp.ne.s32.totalorder %s92, %s93
      %p102 = scmp.eq.s32.totalorder %s19, 0
      %p103 = por %p101, %p102
      %p104 = scmp.ne.s32.totalorder %s92, %s93
      %p105 = scmp.eq.s32.totalorder %s20, 1
      %p106 = por %p104, %p105
      %p108 = scmp.ne.s32.totalorder %s93, %s107
      %p109 = scmp.eq.s32.totalorder %s20, 0
      %p110 = por %p108, %p109
      %s112 = sadd.s32 %s111, 1
      %p115 = scmp.eq.s32.totalorder %s14, 1
      %p116 = scmp.ne.s32.totalorder %s111, %s113
      %p117 = scmp.eq.s32.totalorder %s14, 0
      %p118 = por %p116, %p117
      %p119 = scmp.ne.s32.totalorder %s111, %s113
      %p120 = scmp.eq.s32.totalorder %s19, 1
      %p121 = por %p119, %p120
      %p122 = scmp.ne.s32.totalorder %s113, %s114
      %p123 = scmp.eq.s32.totalorder %s19, 0
      %p124 = por %p122, %p123
      %p125 = scmp.ne.s32.totalorder %s113, %s114
      %p126 = scmp.eq.s32.totalorder %s20, 1
      %p127 = por %p125, %p126
      %p129 = scmp.ne.s32.totalorder %s114, %s128
      %p130 = scmp.eq.s32.totalorder %s20, 0
      %p131 = por %p129, %p130
      %s132 = ssub.s32 %s14, %s21
      %p133 = scmp.eq.s32.totalorder %s132, 0
      %s135 = sadd.s32 %s134, 1
      %s136 = scalar_select %p133, %s134, %s135
      %p139 = pneg %p133
      %p140 = scmp.eq.s32.totalorder %s14, 1
      %p141 = por %p139, %p140
      %p142 = scmp.ne.s32.totalorder %s134, %s137
      %p143 = scmp.eq.s32.totalorder %s14, 0
      %p144 = por %p142, %p143
      %p145 = scmp.ne.s32.totalorder %s134, %s137
      %p146 = scmp.eq.s32.totalorder %s19, 1
      %p147 = por %p145, %p146
      %p148 = scmp.ne.s32.totalorder %s137, %s138
      %p149 = scmp.eq.s32.totalorder %s19, 0
      %p150 = por %p148, %p149
      %p151 = scmp.ne.s32.totalorder %s137, %s138
      %p152 = scmp.eq.s32.totalorder %s20, 1
      %p153 = por %p151, %p152
      %p155 = scmp.ne.s32.totalorder %s138, %s154
      %p156 = scmp.eq.s32.totalorder %s20, 0
      %p157 = por %p155, %p156
      %p158 = scmp.le.s32.totalorder 1, %s14
      %p159 = scmp.lt.s32.totalorder %s14, 3
      %p160 = pnand %p158, %p159
      %p161 = pneg %p160
      // Predicated region
      $region9: #{tpu_custom_call.1} parent=5 // pred_check
        _
      $region10: #{tpu_custom_call.1} parent=5 // pred_check_branch
        %163 = sbr.rel (%p160) target = $region12
      $region11: #{tpu_custom_call.1} parent=5 // pred_region
        %s164 = ssub.s32 %s14, 1
        // Predicated region
        $region13: #{tpu_custom_call.1} parent=11 // pred_check
          %p165 = pneg %p61
        $region14: #{tpu_custom_call.1} parent=11 // pred_check_branch
          %167 = sbr.rel (%p165) target = $region16
        $region15: #{tpu_custom_call.1} parent=11 // pred_region
          _
        $region16: #{tpu_custom_call.1} parent=11 // pred_fallthru
          _
        // Predicated region
        $region17: #{tpu_custom_call.1} parent=11 // pred_check
          %p168 = pneg %p82
        $region18: #{tpu_custom_call.1} parent=11 // pred_check_branch
          %170 = sbr.rel (%p168) target = $region20
        $region19: #{tpu_custom_call.1} parent=11 // pred_region
          _
        $region20: #{tpu_custom_call.1} parent=11 // pred_fallthru
          _
        // Predicated region
        $region21: #{tpu_custom_call.1} parent=11 // pred_check
          %p171 = pneg %p103
        $region22: #{tpu_custom_call.1} parent=11 // pred_check_branch
          %173 = sbr.rel (%p171) target = $region24
        $region23: #{tpu_custom_call.1} parent=11 // pred_region
          _
        $region24: #{tpu_custom_call.1} parent=11 // pred_fallthru
          _
        // Predicated region
        $region25: #{tpu_custom_call.1} parent=11 // pred_check
          %p174 = pneg %p124
        $region26: #{tpu_custom_call.1} parent=11 // pred_check_branch
          %176 = sbr.rel (%p174) target = $region28
        $region27: #{tpu_custom_call.1} parent=11 // pred_region
          _
        $region28: #{tpu_custom_call.1} parent=11 // pred_fallthru
          _
      $region12: #{tpu_custom_call.1} parent=5 // pred_fallthru
        _
      %p177 = scmp.lt.s32.totalorder %s14, 2
      // Predicated region
      $region29: #{tpu_custom_call.1} parent=5 // pred_check
        %p178 = pneg %p177
      $region30: #{tpu_custom_call.1} parent=5 // pred_check_branch
        %180 = sbr.rel (%p178) target = $region32
      $region31: #{tpu_custom_call.1} parent=5 // pred_region
        // Predicated region
        $region33: #{tpu_custom_call.1} parent=31 // pred_check
          %p181 = pneg %p34
        $region34: #{tpu_custom_call.1} parent=31 // pred_check_branch
          %183 = sbr.rel (%p181) target = $region36
        $region35: #{tpu_custom_call.1} parent=31 // pred_region
          %s184 = smul.u32 4, %s14
          %p185 = scmp.lt.s32.totalorder %s184, 7
          %s186 = scalar_select %p185, %s184, 7
          %s187 = smul.addr %s186, 8
          %s188 = scalar_lea.vmem %s0, %s187
          %s189 = smul.u32 4, %s14
        $region36: #{tpu_custom_call.1} parent=31 // pred_fallthru
          _
      $region32: #{tpu_custom_call.1} parent=5 // pred_fallthru
        _
      %p190 = scmp.le.s32.totalorder 1, %s14
      %p191 = scmp.lt.s32.totalorder %s14, 3
      %p192 = pnand %p190, %p191
      %p193 = pneg %p192
      // Predicated region
      $region37: #{tpu_custom_call.1} parent=5 // pred_check
        _
      $region38: #{tpu_custom_call.1} parent=5 // pred_check_branch
        %195 = sbr.rel (%p192) target = $region40
      $region39: #{tpu_custom_call.1} parent=5 // pred_region
        %s196 = ssub.s32 %s14, 1
        %s197 = smul.u32 4, %s19
        %p198 = scmp.lt.s32.totalorder %s197, 7
        %s199 = scalar_select %p198, %s197, 7
        %s200 = smul.addr %s199, 8
        %s201 = scalar_lea.vmem %s0, %s200
        %p202 = pneg %p40
        %p203 = pneg %p37
        %p204 = pneg %p61
        %p205 = pneg %p58
        %p206 = pneg %p82
        %p207 = pneg %p79
        %p208 = pneg %p103
        %p209 = pneg %p100
        %p210 = pneg %p124
        %p211 = pneg %p121
        %p212 = pneg %p150
        %p213 = pneg %p147
        %s214 = sand.u32 %s137, 1
        %s215 = scalar_lea.sflag [#allocation3], %s214
        %s216 = sand.u32 %s137, 1
        %s217 = smul.addr %s216, 4
        %s218 = scalar_lea.vmem [#allocation2], %s217
        %s219 = smul.u32 4, %s19
        %p220 = scmp.lt.s32.totalorder %s219, 7
        %s221 = scalar_select %p220, %s219, 7
        %s222 = smul.addr %s221, 8
        %s223 = scalar_lea.vmem %s0, %s222
        %s224 = smul.u32 4, %s19
        %s225 = smul.u32 4, %s19
        %v226 = vld [vmem:[%s223] sm:$0x1f]
        %v227 = vld [vmem:[%s223 + $0x8] sm:$0x1f]
        %v228 = vld [vmem:[%s223 + $0x10] sm:$0x1f]
        %v229 = vld [vmem:[%s223 + $0x18] sm:$0x1f]
        %v230 = vld [vmem:[%s1] sm:$0xff]
        %v231 = vld [vmem:[%s1 + $0x8] sm:$0xff]
        %v232 = vld [vmem:[%s1 + $0x10] sm:$0xff]
        %v233 = vld [vmem:[%s1 + $0x18] sm:$0xff]
        %v234 = vld [vmem:[%s1 + $0x20] sm:$0xff]
        %v235 = vld [vmem:[%s1 + $0x28] sm:$0xff]
        %v236 = vld [vmem:[%s2] sm:$0xff]
        %v237 = vld [vmem:[%s2 + $0x8] sm:$0xff]
        %v238 = vld [vmem:[%s2 + $0x10] sm:$0xff]
        %v239 = vld [vmem:[%s2 + $0x18] sm:$0xff]
        %v240 = vld [vmem:[%s2 + $0x20] sm:$0xff]
        %v241 = vld [vmem:[%s2 + $0x28] sm:$0xff]
        %243 = vset.pattern.permute.xlu0 0
        %244 = vperm.xlu0 %243, %v236
        %v245 = vpop.permute.xlu0 %244
        %248 = vset.pattern.permute.xlu0 0
        %249 = vperm.xlu0 %248, %v237
        %v250 = vpop.permute.xlu0 %249
        %253 = vset.pattern.permute.xlu0 0
        %254 = vperm.xlu0 %253, %v238
        %v255 = vpop.permute.xlu0 %254
        %258 = vset.pattern.permute.xlu0 0
        %259 = vperm.xlu0 %258, %v239
        %v260 = vpop.permute.xlu0 %259
        %263 = vset.pattern.permute.xlu0 0
        %264 = vperm.xlu0 %263, %v240
        %v265 = vpop.permute.xlu0 %264
        %268 = vset.pattern.permute.xlu0 0
        %269 = vperm.xlu0 %268, %v241
        %v270 = vpop.permute.xlu0 %269
        %vm272 = vcmask 39936
        %v274 = vsel %vm272, %v230, 0
        %v277 = vsel %vm272, %v231, 0
        %v280 = vsel %vm272, %v232, 0
        %v283 = vsel %vm272, %v233, 0
        %v286 = vsel %vm272, %v234, 0
        %v289 = vsel %vm272, %v235, 0
        %vm291 = vcmask 1044480
        %v293 = vsel %vm291, %v226, 0
        %v296 = vsel %vm291, %v227, 0
        %v299 = vsel %vm291, %v228, 0
        %v302 = vsel %vm291, %v229, 0
        %304 = vmatpush.msra.mxu0 0.0
        %305 = vmatpush.msra.mxu0 0.0
        %306 = vmatpush.msra.mxu0 0.0
        %307 = vmatpush.msra.mxu0 0.0
        %308 = vmatpush.msra.mxu0 0.0
        %309 = vmatpush.msra.mxu0 0.0
        %310 = vmatpush.msra.mxu0 0.0
        %311 = vmatpush.msra.mxu0 0.0
        %312 = vmatpush.msra.mxu0 0.0
        %313 = vmatpush.msra.mxu0 0.0
        %314 = vmatpush.msra.mxu0 0.0
        %315 = vmatpush.msra.mxu0 0.0
        %316 = vmatpush.msra.mxu0 0.0
        %317 = vmatpush.msra.mxu0 0.0
        %318 = vmatpush.msra.mxu0 0.0
        %319 = vmatpush.msra.mxu0 %v293
        %320 = vmatmul.f32.gmra.mxu0 %v274
        %v321 = vpop.f32.mrf.mxu0
        %v322 = vadd.f32 %v245, %v321
        %323 = vmatmul.f32.gmra.mxu0 %v277
        %v324 = vpop.f32.mrf.mxu0
        %v325 = vadd.f32 %v250, %v324
        %326 = vmatmul.f32.gmra.mxu0 %v280
        %v327 = vpop.f32.mrf.mxu0
        %v328 = vadd.f32 %v255, %v327
        %329 = vmatmul.f32.gmra.mxu0 %v283
        %v330 = vpop.f32.mrf.mxu0
        %v331 = vadd.f32 %v260, %v330
        %332 = vmatmul.f32.gmra.mxu0 %v286
        %v333 = vpop.f32.mrf.mxu0
        %v334 = vadd.f32 %v265, %v333
        %335 = vmatmul.f32.gmra.mxu0 %v289
        %v336 = vpop.f32.mrf.mxu0
        %v337 = vadd.f32 %v270, %v336
        %338 = vdwg.mxu0
        %339 = vmatpush.msra.mxu0 0.0
        %340 = vmatpush.msra.mxu0 0.0
        %341 = vmatpush.msra.mxu0 0.0
        %342 = vmatpush.msra.mxu0 0.0
        %343 = vmatpush.msra.mxu0 0.0
        %344 = vmatpush.msra.mxu0 0.0
        %345 = vmatpush.msra.mxu0 0.0
        %346 = vmatpush.msra.mxu0 0.0
        %347 = vmatpush.msra.mxu0 0.0
        %348 = vmatpush.msra.mxu0 0.0
        %349 = vmatpush.msra.mxu0 0.0
        %350 = vmatpush.msra.mxu0 0.0
        %351 = vmatpush.msra.mxu0 0.0
        %352 = vmatpush.msra.mxu0 0.0
        %353 = vmatpush.msra.mxu0 0.0
        %354 = vmatpush.msra.mxu0 %v296
        %355 = vmatmul.f32.gmra.mxu0 %v274
        %v356 = vpop.f32.mrf.mxu0
        %v357 = vadd.f32 %v245, %v356
        %358 = vmatmul.f32.gmra.mxu0 %v277
        %v359 = vpop.f32.mrf.mxu0
        %v360 = vadd.f32 %v250, %v359
        %361 = vmatmul.f32.gmra.mxu0 %v280
        %v362 = vpop.f32.mrf.mxu0
        %v363 = vadd.f32 %v255, %v362
        %364 = vmatmul.f32.gmra.mxu0 %v283
        %v365 = vpop.f32.mrf.mxu0
        %v366 = vadd.f32 %v260, %v365
        %367 = vmatmul.f32.gmra.mxu0 %v286
        %v368 = vpop.f32.mrf.mxu0
        %v369 = vadd.f32 %v265, %v368
        %370 = vmatmul.f32.gmra.mxu0 %v289
        %v371 = vpop.f32.mrf.mxu0
        %v372 = vadd.f32 %v270, %v371
        %373 = vdwg.mxu0
        %374 = vmatpush.msra.mxu0 0.0
        %375 = vmatpush.msra.mxu0 0.0
        %376 = vmatpush.msra.mxu0 0.0
        %377 = vmatpush.msra.mxu0 0.0
        %378 = vmatpush.msra.mxu0 0.0
        %379 = vmatpush.msra.mxu0 0.0
        %380 = vmatpush.msra.mxu0 0.0
        %381 = vmatpush.msra.mxu0 0.0
        %382 = vmatpush.msra.mxu0 0.0
        %383 = vmatpush.msra.mxu0 0.0
        %384 = vmatpush.msra.mxu0 0.0
        %385 = vmatpush.msra.mxu0 0.0
        %386 = vmatpush.msra.mxu0 0.0
        %387 = vmatpush.msra.mxu0 0.0
        %388 = vmatpush.msra.mxu0 0.0
        %389 = vmatpush.msra.mxu0 %v299
        %390 = vmatmul.f32.gmra.mxu0 %v274
        %v391 = vpop.f32.mrf.mxu0
        %v392 = vadd.f32 %v245, %v391
        %393 = vmatmul.f32.gmra.mxu0 %v277
        %v394 = vpop.f32.mrf.mxu0
        %v395 = vadd.f32 %v250, %v394
        %396 = vmatmul.f32.gmra.mxu0 %v280
        %v397 = vpop.f32.mrf.mxu0
        %v398 = vadd.f32 %v255, %v397
        %399 = vmatmul.f32.gmra.mxu0 %v283
        %v400 = vpop.f32.mrf.mxu0
        %v401 = vadd.f32 %v260, %v400
        %402 = vmatmul.f32.gmra.mxu0 %v286
        %v403 = vpop.f32.mrf.mxu0
        %v404 = vadd.f32 %v265, %v403
        %405 = vmatmul.f32.gmra.mxu0 %v289
        %v406 = vpop.f32.mrf.mxu0
        %v407 = vadd.f32 %v270, %v406
        %408 = vdwg.mxu0
        %409 = vmatpush.msra.mxu0 0.0
        %410 = vmatpush.msra.mxu0 0.0
        %411 = vmatpush.msra.mxu0 0.0
        %412 = vmatpush.msra.mxu0 0.0
        %413 = vmatpush.msra.mxu0 0.0
        %414 = vmatpush.msra.mxu0 0.0
        %415 = vmatpush.msra.mxu0 0.0
        %416 = vmatpush.msra.mxu0 0.0
        %417 = vmatpush.msra.mxu0 0.0
        %418 = vmatpush.msra.mxu0 0.0
        %419 = vmatpush.msra.mxu0 0.0
        %420 = vmatpush.msra.mxu0 0.0
        %421 = vmatpush.msra.mxu0 0.0
        %422 = vmatpush.msra.mxu0 0.0
        %423 = vmatpush.msra.mxu0 0.0
        %424 = vmatpush.msra.mxu0 %v302
        %425 = vmatmul.f32.gmra.mxu0 %v274
        %v426 = vpop.f32.mrf.mxu0
        %v427 = vadd.f32 %v245, %v426
        %428 = vmatmul.f32.gmra.mxu0 %v277
        %v429 = vpop.f32.mrf.mxu0
        %v430 = vadd.f32 %v250, %v429
        %431 = vmatmul.f32.gmra.mxu0 %v280
        %v432 = vpop.f32.mrf.mxu0
        %v433 = vadd.f32 %v255, %v432
        %434 = vmatmul.f32.gmra.mxu0 %v283
        %v435 = vpop.f32.mrf.mxu0
        %v436 = vadd.f32 %v260, %v435
        %437 = vmatmul.f32.gmra.mxu0 %v286
        %v438 = vpop.f32.mrf.mxu0
        %v439 = vadd.f32 %v265, %v438
        %440 = vmatmul.f32.gmra.mxu0 %v289
        %v441 = vpop.f32.mrf.mxu0
        %v442 = vadd.f32 %v270, %v441
        %443 = vdwg.mxu0
        %v444 = vmax.f32 %v322, 0.0
        %v445 = vmax.f32 %v357, 0.0
        %v446 = vmax.f32 %v392, 0.0
        %v447 = vmax.f32 %v427, 0.0
        %vm448 = vcmp.ne.f32.partialorder %v322, %v322
        %vm449 = vcmp.ne.f32.partialorder %v357, %v357
        %vm450 = vcmp.ne.f32.partialorder %v392, %v392
        %vm451 = vcmp.ne.f32.partialorder %v427, %v427
        %v452 = vadd.f32 %v322, 0.0
        %v453 = vadd.f32 %v357, 0.0
        %v454 = vadd.f32 %v392, 0.0
        %v455 = vadd.f32 %v427, 0.0
        %v456 = vand.u32 2147483647, %v322
        %v457 = vand.u32 2147483647, %v357
        %v458 = vand.u32 2147483647, %v392
        %v459 = vand.u32 2147483647, %v427
        %v460 = vsub.f32 0.0, %v456
        %v461 = vsub.f32 0.0, %v457
        %v462 = vsub.f32 0.0, %v458
        %v463 = vsub.f32 0.0, %v459
        %v464 = vmul.f32 %v460, 1.442695
        %v465 = vpow.pop %v464
        %v466 = vmul.f32 %v461, 1.442695
        %v467 = vpow.pop %v466
        %v468 = vmul.f32 %v462, 1.442695
        %v469 = vpow.pop %v468
        %v470 = vmul.f32 %v463, 1.442695
        %v471 = vpow.pop %v470
        %v472 = vadd.f32 %v465, 1.0
        %v473 = vlog2.pop %v472
        %v474 = vmul.f32 %v473, 0.6931472
        %v475 = vmul.f32 -0.5, %v465
        %v476 = vadd.f32 %v475, 1.0
        %v477 = vmul.f32 %v476, %v465
        %v478 = vand.u32 2147483647, %v465
        %vm479 = vcmp.lt.f32.partialorder %v478, 0.0004427343
        %v480 = vsel %vm479, %v477, %v474
        %v481 = vadd.f32 %v467, 1.0
        %v482 = vlog2.pop %v481
        %v483 = vmul.f32 %v482, 0.6931472
        %v484 = vmul.f32 -0.5, %v467
        %v485 = vadd.f32 %v484, 1.0
        %v486 = vmul.f32 %v485, %v467
        %v487 = vand.u32 2147483647, %v467
        %vm488 = vcmp.lt.f32.partialorder %v487, 0.0004427343
        %v489 = vsel %vm488, %v486, %v483
        %v490 = vadd.f32 %v469, 1.0
        %v491 = vlog2.pop %v490
        %v492 = vmul.f32 %v491, 0.6931472
        %v493 = vmul.f32 -0.5, %v469
        %v494 = vadd.f32 %v493, 1.0
        %v495 = vmul.f32 %v494, %v469
        %v496 = vand.u32 2147483647, %v469
        %vm497 = vcmp.lt.f32.partialorder %v496, 0.0004427343
        %v498 = vsel %vm497, %v495, %v492
        %v499 = vadd.f32 %v471, 1.0
        %v500 = vlog2.pop %v499
        %v501 = vmul.f32 %v500, 0.6931472
        %v502 = vmul.f32 -0.5, %v471
        %v503 = vadd.f32 %v502, 1.0
        %v504 = vmul.f32 %v503, %v471
        %v505 = vand.u32 2147483647, %v471
        %vm506 = vcmp.lt.f32.partialorder %v505, 0.0004427343
        %v507 = vsel %vm506, %v504, %v501
        %v508 = vadd.f32 %v444, %v480
        %v509 = vadd.f32 %v445, %v489
        %v510 = vadd.f32 %v446, %v498
        %v511 = vadd.f32 %v447, %v507
        %v512 = vsel %vm448, %v452, %v508
        %v513 = vsel %vm449, %v453, %v509
        %v514 = vsel %vm450, %v454, %v510
        %v515 = vsel %vm451, %v455, %v511
        %v516 = vsub.f32 0.0, %v512
        %v517 = vsub.f32 0.0, %v513
        %v518 = vsub.f32 0.0, %v514
        %v519 = vsub.f32 0.0, %v515
        %v520 = vld [vmem:[%s3] sm:$0xff]
        %vm521 = vcmask 64512
        %v523 = vsel %vm521, %v520, 0
        %525 = vmatpush.msra.mxu0 0.0
        %526 = vmatpush.msra.mxu0 0.0
        %527 = vmatpush.msra.mxu0 0.0
        %528 = vmatpush.msra.mxu0 0.0
        %529 = vmatpush.msra.mxu0 0.0
        %530 = vmatpush.msra.mxu0 0.0
        %531 = vmatpush.msra.mxu0 0.0
        %532 = vmatpush.msra.mxu0 0.0
        %533 = vmatpush.msra.mxu0 0.0
        %534 = vmatpush.msra.mxu0 0.0
        %535 = vmatpush.msra.mxu0 0.0
        %536 = vmatpush.msra.mxu0 0.0
        %537 = vmatpush.msra.mxu0 0.0
        %538 = vmatpush.msra.mxu0 0.0
        %539 = vmatpush.msra.mxu0 0.0
        %540 = vmatpush.msra.mxu0 %v516
        %541 = vmatmul.f32.gmra.mxu0 %v523
        %v542 = vpop.f32.mrf.mxu0
        %v543 = vadd.f32 %v325, %v542
        %544 = vdwg.mxu0
        %545 = vmatpush.msra.mxu0 0.0
        %546 = vmatpush.msra.mxu0 0.0
        %547 = vmatpush.msra.mxu0 0.0
        %548 = vmatpush.msra.mxu0 0.0
        %549 = vmatpush.msra.mxu0 0.0
        %550 = vmatpush.msra.mxu0 0.0
        %551 = vmatpush.msra.mxu0 0.0
        %552 = vmatpush.msra.mxu0 0.0
        %553 = vmatpush.msra.mxu0 0.0
        %554 = vmatpush.msra.mxu0 0.0
        %555 = vmatpush.msra.mxu0 0.0
        %556 = vmatpush.msra.mxu0 0.0
        %557 = vmatpush.msra.mxu0 0.0
        %558 = vmatpush.msra.mxu0 0.0
        %559 = vmatpush.msra.mxu0 0.0
        %560 = vmatpush.msra.mxu0 %v517
        %561 = vmatmul.f32.gmra.mxu0 %v523
        %v562 = vpop.f32.mrf.mxu0
        %v563 = vadd.f32 %v360, %v562
        %564 = vdwg.mxu0
        %565 = vmatpush.msra.mxu0 0.0
        %566 = vmatpush.msra.mxu0 0.0
        %567 = vmatpush.msra.mxu0 0.0
        %568 = vmatpush.msra.mxu0 0.0
        %569 = vmatpush.msra.mxu0 0.0
        %570 = vmatpush.msra.mxu0 0.0
        %571 = vmatpush.msra.mxu0 0.0
        %572 = vmatpush.msra.mxu0 0.0
        %573 = vmatpush.msra.mxu0 0.0
        %574 = vmatpush.msra.mxu0 0.0
        %575 = vmatpush.msra.mxu0 0.0
        %576 = vmatpush.msra.mxu0 0.0
        %577 = vmatpush.msra.mxu0 0.0
        %578 = vmatpush.msra.mxu0 0.0
        %579 = vmatpush.msra.mxu0 0.0
        %580 = vmatpush.msra.mxu0 %v518
        %581 = vmatmul.f32.gmra.mxu0 %v523
        %v582 = vpop.f32.mrf.mxu0
        %v583 = vadd.f32 %v395, %v582
        %584 = vdwg.mxu0
        %585 = vmatpush.msra.mxu0 0.0
        %586 = vmatpush.msra.mxu0 0.0
        %587 = vmatpush.msra.mxu0 0.0
        %588 = vmatpush.msra.mxu0 0.0
        %589 = vmatpush.msra.mxu0 0.0
        %590 = vmatpush.msra.mxu0 0.0
        %591 = vmatpush.msra.mxu0 0.0
        %592 = vmatpush.msra.mxu0 0.0
        %593 = vmatpush.msra.mxu0 0.0
        %594 = vmatpush.msra.mxu0 0.0
        %595 = vmatpush.msra.mxu0 0.0
        %596 = vmatpush.msra.mxu0 0.0
        %597 = vmatpush.msra.mxu0 0.0
        %598 = vmatpush.msra.mxu0 0.0
        %599 = vmatpush.msra.mxu0 0.0
        %600 = vmatpush.msra.mxu0 %v519
        %601 = vmatmul.f32.gmra.mxu0 %v523
        %v602 = vpop.f32.mrf.mxu0
        %v603 = vadd.f32 %v430, %v602
        %604 = vdwg.mxu0
        %v605 = vmax.f32 %v543, 0.0
        %v606 = vmax.f32 %v563, 0.0
        %v607 = vmax.f32 %v583, 0.0
        %v608 = vmax.f32 %v603, 0.0
        %vm609 = vcmp.ne.f32.partialorder %v543, %v543
        %vm610 = vcmp.ne.f32.partialorder %v563, %v563
        %vm611 = vcmp.ne.f32.partialorder %v583, %v583
        %vm612 = vcmp.ne.f32.partialorder %v603, %v603
        %v613 = vadd.f32 %v543, 0.0
        %v614 = vadd.f32 %v563, 0.0
        %v615 = vadd.f32 %v583, 0.0
        %v616 = vadd.f32 %v603, 0.0
        %v617 = vand.u32 2147483647, %v543
        %v618 = vand.u32 2147483647, %v563
        %v619 = vand.u32 2147483647, %v583
        %v620 = vand.u32 2147483647, %v603
        %v621 = vsub.f32 0.0, %v617
        %v622 = vsub.f32 0.0, %v618
        %v623 = vsub.f32 0.0, %v619
        %v624 = vsub.f32 0.0, %v620
        %v625 = vmul.f32 %v621, 1.442695
        %v626 = vpow.pop %v625
        %v627 = vmul.f32 %v622, 1.442695
        %v628 = vpow.pop %v627
        %v629 = vmul.f32 %v623, 1.442695
        %v630 = vpow.pop %v629
        %v631 = vmul.f32 %v624, 1.442695
        %v632 = vpow.pop %v631
        %v633 = vadd.f32 %v626, 1.0
        %v634 = vlog2.pop %v633
        %v635 = vmul.f32 %v634, 0.6931472
        %v636 = vmul.f32 -0.5, %v626
        %v637 = vadd.f32 %v636, 1.0
        %v638 = vmul.f32 %v637, %v626
        %v639 = vand.u32 2147483647, %v626
        %vm640 = vcmp.lt.f32.partialorder %v639, 0.0004427343
        %v641 = vsel %vm640, %v638, %v635
        %v642 = vadd.f32 %v628, 1.0
        %v643 = vlog2.pop %v642
        %v644 = vmul.f32 %v643, 0.6931472
        %v645 = vmul.f32 -0.5, %v628
        %v646 = vadd.f32 %v645, 1.0
        %v647 = vmul.f32 %v646, %v628
        %v648 = vand.u32 2147483647, %v628
        %vm649 = vcmp.lt.f32.partialorder %v648, 0.0004427343
        %v650 = vsel %vm649, %v647, %v644
        %v651 = vadd.f32 %v630, 1.0
        %v652 = vlog2.pop %v651
        %v653 = vmul.f32 %v652, 0.6931472
        %v654 = vmul.f32 -0.5, %v630
        %v655 = vadd.f32 %v654, 1.0
        %v656 = vmul.f32 %v655, %v630
        %v657 = vand.u32 2147483647, %v630
        %vm658 = vcmp.lt.f32.partialorder %v657, 0.0004427343
        %v659 = vsel %vm658, %v656, %v653
        %v660 = vadd.f32 %v632, 1.0
        %v661 = vlog2.pop %v660
        %v662 = vmul.f32 %v661, 0.6931472
        %v663 = vmul.f32 -0.5, %v632
        %v664 = vadd.f32 %v663, 1.0
        %v665 = vmul.f32 %v664, %v632
        %v666 = vand.u32 2147483647, %v632
        %vm667 = vcmp.lt.f32.partialorder %v666, 0.0004427343
        %v668 = vsel %vm667, %v665, %v662
        %v669 = vadd.f32 %v605, %v641
        %v670 = vadd.f32 %v606, %v650
        %v671 = vadd.f32 %v607, %v659
        %v672 = vadd.f32 %v608, %v668
        %v673 = vsel %vm609, %v613, %v669
        %v674 = vsel %vm610, %v614, %v670
        %v675 = vsel %vm611, %v615, %v671
        %v676 = vsel %vm612, %v616, %v672
        %v677 = vsub.f32 0.0, %v673
        %v678 = vsub.f32 0.0, %v674
        %v679 = vsub.f32 0.0, %v675
        %v680 = vsub.f32 0.0, %v676
        %s681 = scalar_lea.vmem %s3, 8
        %v682 = vld [vmem:[%s681] sm:$0xff]
        %v684 = vsel %vm521, %v682, 0
        %686 = vmatpush.msra.mxu0 0.0
        %687 = vmatpush.msra.mxu0 0.0
        %688 = vmatpush.msra.mxu0 0.0
        %689 = vmatpush.msra.mxu0 0.0
        %690 = vmatpush.msra.mxu0 0.0
        %691 = vmatpush.msra.mxu0 0.0
        %692 = vmatpush.msra.mxu0 0.0
        %693 = vmatpush.msra.mxu0 0.0
        %694 = vmatpush.msra.mxu0 0.0
        %695 = vmatpush.msra.mxu0 0.0
        %696 = vmatpush.msra.mxu0 0.0
        %697 = vmatpush.msra.mxu0 0.0
        %698 = vmatpush.msra.mxu0 0.0
        %699 = vmatpush.msra.mxu0 0.0
        %700 = vmatpush.msra.mxu0 0.0
        %701 = vmatpush.msra.mxu0 %v677
        %702 = vmatmul.f32.gmra.mxu0 %v684
        %v703 = vpop.f32.mrf.mxu0
        %v704 = vadd.f32 %v328, %v703
        %705 = vdwg.mxu0
        %706 = vmatpush.msra.mxu0 0.0
        %707 = vmatpush.msra.mxu0 0.0
        %708 = vmatpush.msra.mxu0 0.0
        %709 = vmatpush.msra.mxu0 0.0
        %710 = vmatpush.msra.mxu0 0.0
        %711 = vmatpush.msra.mxu0 0.0
        %712 = vmatpush.msra.mxu0 0.0
        %713 = vmatpush.msra.mxu0 0.0
        %714 = vmatpush.msra.mxu0 0.0
        %715 = vmatpush.msra.mxu0 0.0
        %716 = vmatpush.msra.mxu0 0.0
        %717 = vmatpush.msra.mxu0 0.0
        %718 = vmatpush.msra.mxu0 0.0
        %719 = vmatpush.msra.mxu0 0.0
        %720 = vmatpush.msra.mxu0 0.0
        %721 = vmatpush.msra.mxu0 %v678
        %722 = vmatmul.f32.gmra.mxu0 %v684
        %v723 = vpop.f32.mrf.mxu0
        %v724 = vadd.f32 %v363, %v723
        %725 = vdwg.mxu0
        %726 = vmatpush.msra.mxu0 0.0
        %727 = vmatpush.msra.mxu0 0.0
        %728 = vmatpush.msra.mxu0 0.0
        %729 = vmatpush.msra.mxu0 0.0
        %730 = vmatpush.msra.mxu0 0.0
        %731 = vmatpush.msra.mxu0 0.0
        %732 = vmatpush.msra.mxu0 0.0
        %733 = vmatpush.msra.mxu0 0.0
        %734 = vmatpush.msra.mxu0 0.0
        %735 = vmatpush.msra.mxu0 0.0
        %736 = vmatpush.msra.mxu0 0.0
        %737 = vmatpush.msra.mxu0 0.0
        %738 = vmatpush.msra.mxu0 0.0
        %739 = vmatpush.msra.mxu0 0.0
        %740 = vmatpush.msra.mxu0 0.0
        %741 = vmatpush.msra.mxu0 %v679
        %742 = vmatmul.f32.gmra.mxu0 %v684
        %v743 = vpop.f32.mrf.mxu0
        %v744 = vadd.f32 %v398, %v743
        %745 = vdwg.mxu0
        %746 = vmatpush.msra.mxu0 0.0
        %747 = vmatpush.msra.mxu0 0.0
        %748 = vmatpush.msra.mxu0 0.0
        %749 = vmatpush.msra.mxu0 0.0
        %750 = vmatpush.msra.mxu0 0.0
        %751 = vmatpush.msra.mxu0 0.0
        %752 = vmatpush.msra.mxu0 0.0
        %753 = vmatpush.msra.mxu0 0.0
        %754 = vmatpush.msra.mxu0 0.0
        %755 = vmatpush.msra.mxu0 0.0
        %756 = vmatpush.msra.mxu0 0.0
        %757 = vmatpush.msra.mxu0 0.0
        %758 = vmatpush.msra.mxu0 0.0
        %759 = vmatpush.msra.mxu0 0.0
        %760 = vmatpush.msra.mxu0 0.0
        %761 = vmatpush.msra.mxu0 %v680
        %762 = vmatmul.f32.gmra.mxu0 %v684
        %v763 = vpop.f32.mrf.mxu0
        %v764 = vadd.f32 %v433, %v763
        %765 = vdwg.mxu0
        %v766 = vmax.f32 %v704, 0.0
        %v767 = vmax.f32 %v724, 0.0
        %v768 = vmax.f32 %v744, 0.0
        %v769 = vmax.f32 %v764, 0.0
        %vm770 = vcmp.ne.f32.partialorder %v704, %v704
        %vm771 = vcmp.ne.f32.partialorder %v724, %v724
        %vm772 = vcmp.ne.f32.partialorder %v744, %v744
        %vm773 = vcmp.ne.f32.partialorder %v764, %v764
        %v774 = vadd.f32 %v704, 0.0
        %v775 = vadd.f32 %v724, 0.0
        %v776 = vadd.f32 %v744, 0.0
        %v777 = vadd.f32 %v764, 0.0
        %v778 = vand.u32 2147483647, %v704
        %v779 = vand.u32 2147483647, %v724
        %v780 = vand.u32 2147483647, %v744
        %v781 = vand.u32 2147483647, %v764
        %v782 = vsub.f32 0.0, %v778
        %v783 = vsub.f32 0.0, %v779
        %v784 = vsub.f32 0.0, %v780
        %v785 = vsub.f32 0.0, %v781
        %v786 = vmul.f32 %v782, 1.442695
        %v787 = vpow.pop %v786
        %v788 = vmul.f32 %v783, 1.442695
        %v789 = vpow.pop %v788
        %v790 = vmul.f32 %v784, 1.442695
        %v791 = vpow.pop %v790
        %v792 = vmul.f32 %v785, 1.442695
        %v793 = vpow.pop %v792
        %v794 = vadd.f32 %v787, 1.0
        %v795 = vlog2.pop %v794
        %v796 = vmul.f32 %v795, 0.6931472
        %v797 = vmul.f32 -0.5, %v787
        %v798 = vadd.f32 %v797, 1.0
        %v799 = vmul.f32 %v798, %v787
        %v800 = vand.u32 2147483647, %v787
        %vm801 = vcmp.lt.f32.partialorder %v800, 0.0004427343
        %v802 = vsel %vm801, %v799, %v796
        %v803 = vadd.f32 %v789, 1.0
        %v804 = vlog2.pop %v803
        %v805 = vmul.f32 %v804, 0.6931472
        %v806 = vmul.f32 -0.5, %v789
        %v807 = vadd.f32 %v806, 1.0
        %v808 = vmul.f32 %v807, %v789
        %v809 = vand.u32 2147483647, %v789
        %vm810 = vcmp.lt.f32.partialorder %v809, 0.0004427343
        %v811 = vsel %vm810, %v808, %v805
        %v812 = vadd.f32 %v791, 1.0
        %v813 = vlog2.pop %v812
        %v814 = vmul.f32 %v813, 0.6931472
        %v815 = vmul.f32 -0.5, %v791
        %v816 = vadd.f32 %v815, 1.0
        %v817 = vmul.f32 %v816, %v791
        %v818 = vand.u32 2147483647, %v791
        %vm819 = vcmp.lt.f32.partialorder %v818, 0.0004427343
        %v820 = vsel %vm819, %v817, %v814
        %v821 = vadd.f32 %v793, 1.0
        %v822 = vlog2.pop %v821
        %v823 = vmul.f32 %v822, 0.6931472
        %v824 = vmul.f32 -0.5, %v793
        %v825 = vadd.f32 %v824, 1.0
        %v826 = vmul.f32 %v825, %v793
        %v827 = vand.u32 2147483647, %v793
        %vm828 = vcmp.lt.f32.partialorder %v827, 0.0004427343
        %v829 = vsel %vm828, %v826, %v823
        %v830 = vadd.f32 %v766, %v802
        %v831 = vadd.f32 %v767, %v811
        %v832 = vadd.f32 %v768, %v820
        %v833 = vadd.f32 %v769, %v829
        %v834 = vsel %vm770, %v774, %v830
        %v835 = vsel %vm771, %v775, %v831
        %v836 = vsel %vm772, %v776, %v832
        %v837 = vsel %vm773, %v777, %v833
        %v838 = vsub.f32 0.0, %v834
        %v839 = vsub.f32 0.0, %v835
        %v840 = vsub.f32 0.0, %v836
        %v841 = vsub.f32 0.0, %v837
        %s842 = scalar_lea.vmem %s3, 16
        %v843 = vld [vmem:[%s842] sm:$0xff]
        %v845 = vsel %vm521, %v843, 0
        %847 = vmatpush.msra.mxu0 0.0
        %848 = vmatpush.msra.mxu0 0.0
        %849 = vmatpush.msra.mxu0 0.0
        %850 = vmatpush.msra.mxu0 0.0
        %851 = vmatpush.msra.mxu0 0.0
        %852 = vmatpush.msra.mxu0 0.0
        %853 = vmatpush.msra.mxu0 0.0
        %854 = vmatpush.msra.mxu0 0.0
        %855 = vmatpush.msra.mxu0 0.0
        %856 = vmatpush.msra.mxu0 0.0
        %857 = vmatpush.msra.mxu0 0.0
        %858 = vmatpush.msra.mxu0 0.0
        %859 = vmatpush.msra.mxu0 0.0
        %860 = vmatpush.msra.mxu0 0.0
        %861 = vmatpush.msra.mxu0 0.0
        %862 = vmatpush.msra.mxu0 %v838
        %863 = vmatmul.f32.gmra.mxu0 %v845
        %v864 = vpop.f32.mrf.mxu0
        %v865 = vadd.f32 %v331, %v864
        %866 = vdwg.mxu0
        %867 = vmatpush.msra.mxu0 0.0
        %868 = vmatpush.msra.mxu0 0.0
        %869 = vmatpush.msra.mxu0 0.0
        %870 = vmatpush.msra.mxu0 0.0
        %871 = vmatpush.msra.mxu0 0.0
        %872 = vmatpush.msra.mxu0 0.0
        %873 = vmatpush.msra.mxu0 0.0
        %874 = vmatpush.msra.mxu0 0.0
        %875 = vmatpush.msra.mxu0 0.0
        %876 = vmatpush.msra.mxu0 0.0
        %877 = vmatpush.msra.mxu0 0.0
        %878 = vmatpush.msra.mxu0 0.0
        %879 = vmatpush.msra.mxu0 0.0
        %880 = vmatpush.msra.mxu0 0.0
        %881 = vmatpush.msra.mxu0 0.0
        %882 = vmatpush.msra.mxu0 %v839
        %883 = vmatmul.f32.gmra.mxu0 %v845
        %v884 = vpop.f32.mrf.mxu0
        %v885 = vadd.f32 %v366, %v884
        %886 = vdwg.mxu0
        %887 = vmatpush.msra.mxu0 0.0
        %888 = vmatpush.msra.mxu0 0.0
        %889 = vmatpush.msra.mxu0 0.0
        %890 = vmatpush.msra.mxu0 0.0
        %891 = vmatpush.msra.mxu0 0.0
        %892 = vmatpush.msra.mxu0 0.0
        %893 = vmatpush.msra.mxu0 0.0
        %894 = vmatpush.msra.mxu0 0.0
        %895 = vmatpush.msra.mxu0 0.0
        %896 = vmatpush.msra.mxu0 0.0
        %897 = vmatpush.msra.mxu0 0.0
        %898 = vmatpush.msra.mxu0 0.0
        %899 = vmatpush.msra.mxu0 0.0
        %900 = vmatpush.msra.mxu0 0.0
        %901 = vmatpush.msra.mxu0 0.0
        %902 = vmatpush.msra.mxu0 %v840
        %903 = vmatmul.f32.gmra.mxu0 %v845
        %v904 = vpop.f32.mrf.mxu0
        %v905 = vadd.f32 %v401, %v904
        %906 = vdwg.mxu0
        %907 = vmatpush.msra.mxu0 0.0
        %908 = vmatpush.msra.mxu0 0.0
        %909 = vmatpush.msra.mxu0 0.0
        %910 = vmatpush.msra.mxu0 0.0
        %911 = vmatpush.msra.mxu0 0.0
        %912 = vmatpush.msra.mxu0 0.0
        %913 = vmatpush.msra.mxu0 0.0
        %914 = vmatpush.msra.mxu0 0.0
        %915 = vmatpush.msra.mxu0 0.0
        %916 = vmatpush.msra.mxu0 0.0
        %917 = vmatpush.msra.mxu0 0.0
        %918 = vmatpush.msra.mxu0 0.0
        %919 = vmatpush.msra.mxu0 0.0
        %920 = vmatpush.msra.mxu0 0.0
        %921 = vmatpush.msra.mxu0 0.0
        %922 = vmatpush.msra.mxu0 %v841
        %923 = vmatmul.f32.gmra.mxu0 %v845
        %v924 = vpop.f32.mrf.mxu0
        %v925 = vadd.f32 %v436, %v924
        %926 = vdwg.mxu0
        %v927 = vmax.f32 %v865, 0.0
        %v928 = vmax.f32 %v885, 0.0
        %v929 = vmax.f32 %v905, 0.0
        %v930 = vmax.f32 %v925, 0.0
        %vm931 = vcmp.ne.f32.partialorder %v865, %v865
        %vm932 = vcmp.ne.f32.partialorder %v885, %v885
        %vm933 = vcmp.ne.f32.partialorder %v905, %v905
        %vm934 = vcmp.ne.f32.partialorder %v925, %v925
        %v935 = vadd.f32 %v865, 0.0
        %v936 = vadd.f32 %v885, 0.0
        %v937 = vadd.f32 %v905, 0.0
        %v938 = vadd.f32 %v925, 0.0
        %v939 = vand.u32 2147483647, %v865
        %v940 = vand.u32 2147483647, %v885
        %v941 = vand.u32 2147483647, %v905
        %v942 = vand.u32 2147483647, %v925
        %v943 = vsub.f32 0.0, %v939
        %v944 = vsub.f32 0.0, %v940
        %v945 = vsub.f32 0.0, %v941
        %v946 = vsub.f32 0.0, %v942
        %v947 = vmul.f32 %v943, 1.442695
        %v948 = vpow.pop %v947
        %v949 = vmul.f32 %v944, 1.442695
        %v950 = vpow.pop %v949
        %v951 = vmul.f32 %v945, 1.442695
        %v952 = vpow.pop %v951
        %v953 = vmul.f32 %v946, 1.442695
        %v954 = vpow.pop %v953
        %v955 = vadd.f32 %v948, 1.0
        %v956 = vlog2.pop %v955
        %v957 = vmul.f32 %v956, 0.6931472
        %v958 = vmul.f32 -0.5, %v948
        %v959 = vadd.f32 %v958, 1.0
        %v960 = vmul.f32 %v959, %v948
        %v961 = vand.u32 2147483647, %v948
        %vm962 = vcmp.lt.f32.partialorder %v961, 0.0004427343
        %v963 = vsel %vm962, %v960, %v957
        %v964 = vadd.f32 %v950, 1.0
        %v965 = vlog2.pop %v964
        %v966 = vmul.f32 %v965, 0.6931472
        %v967 = vmul.f32 -0.5, %v950
        %v968 = vadd.f32 %v967, 1.0
        %v969 = vmul.f32 %v968, %v950
        %v970 = vand.u32 2147483647, %v950
        %vm971 = vcmp.lt.f32.partialorder %v970, 0.0004427343
        %v972 = vsel %vm971, %v969, %v966
        %v973 = vadd.f32 %v952, 1.0
        %v974 = vlog2.pop %v973
        %v975 = vmul.f32 %v974, 0.6931472
        %v976 = vmul.f32 -0.5, %v952
        %v977 = vadd.f32 %v976, 1.0
        %v978 = vmul.f32 %v977, %v952
        %v979 = vand.u32 2147483647, %v952
        %vm980 = vcmp.lt.f32.partialorder %v979, 0.0004427343
        %v981 = vsel %vm980, %v978, %v975
        %v982 = vadd.f32 %v954, 1.0
        %v983 = vlog2.pop %v982
        %v984 = vmul.f32 %v983, 0.6931472
        %v985 = vmul.f32 -0.5, %v954
        %v986 = vadd.f32 %v985, 1.0
        %v987 = vmul.f32 %v986, %v954
        %v988 = vand.u32 2147483647, %v954
        %vm989 = vcmp.lt.f32.partialorder %v988, 0.0004427343
        %v990 = vsel %vm989, %v987, %v984
        %v991 = vadd.f32 %v927, %v963
        %v992 = vadd.f32 %v928, %v972
        %v993 = vadd.f32 %v929, %v981
        %v994 = vadd.f32 %v930, %v990
        %v995 = vsel %vm931, %v935, %v991
        %v996 = vsel %vm932, %v936, %v992
        %v997 = vsel %vm933, %v937, %v993
        %v998 = vsel %vm934, %v938, %v994
        %v999 = vsub.f32 0.0, %v995
        %v1000 = vsub.f32 0.0, %v996
        %v1001 = vsub.f32 0.0, %v997
        %v1002 = vsub.f32 0.0, %v998
        %s1003 = scalar_lea.vmem %s3, 24
        %v1004 = vld [vmem:[%s1003] sm:$0xff]
        %v1006 = vsel %vm521, %v1004, 0
        %1008 = vmatpush.msra.mxu0 0.0
        %1009 = vmatpush.msra.mxu0 0.0
        %1010 = vmatpush.msra.mxu0 0.0
        %1011 = vmatpush.msra.mxu0 0.0
        %1012 = vmatpush.msra.mxu0 0.0
        %1013 = vmatpush.msra.mxu0 0.0
        %1014 = vmatpush.msra.mxu0 0.0
        %1015 = vmatpush.msra.mxu0 0.0
        %1016 = vmatpush.msra.mxu0 0.0
        %1017 = vmatpush.msra.mxu0 0.0
        %1018 = vmatpush.msra.mxu0 0.0
        %1019 = vmatpush.msra.mxu0 0.0
        %1020 = vmatpush.msra.mxu0 0.0
        %1021 = vmatpush.msra.mxu0 0.0
        %1022 = vmatpush.msra.mxu0 0.0
        %1023 = vmatpush.msra.mxu0 %v999
        %1024 = vmatmul.f32.gmra.mxu0 %v1006
        %v1025 = vpop.f32.mrf.mxu0
        %v1026 = vadd.f32 %v334, %v1025
        %1027 = vdwg.mxu0
        %1028 = vmatpush.msra.mxu0 0.0
        %1029 = vmatpush.msra.mxu0 0.0
        %1030 = vmatpush.msra.mxu0 0.0
        %1031 = vmatpush.msra.mxu0 0.0
        %1032 = vmatpush.msra.mxu0 0.0
        %1033 = vmatpush.msra.mxu0 0.0
        %1034 = vmatpush.msra.mxu0 0.0
        %1035 = vmatpush.msra.mxu0 0.0
        %1036 = vmatpush.msra.mxu0 0.0
        %1037 = vmatpush.msra.mxu0 0.0
        %1038 = vmatpush.msra.mxu0 0.0
        %1039 = vmatpush.msra.mxu0 0.0
        %1040 = vmatpush.msra.mxu0 0.0
        %1041 = vmatpush.msra.mxu0 0.0
        %1042 = vmatpush.msra.mxu0 0.0
        %1043 = vmatpush.msra.mxu0 %v1000
        %1044 = vmatmul.f32.gmra.mxu0 %v1006
        %v1045 = vpop.f32.mrf.mxu0
        %v1046 = vadd.f32 %v369, %v1045
        %1047 = vdwg.mxu0
        %1048 = vmatpush.msra.mxu0 0.0
        %1049 = vmatpush.msra.mxu0 0.0
        %1050 = vmatpush.msra.mxu0 0.0
        %1051 = vmatpush.msra.mxu0 0.0
        %1052 = vmatpush.msra.mxu0 0.0
        %1053 = vmatpush.msra.mxu0 0.0
        %1054 = vmatpush.msra.mxu0 0.0
        %1055 = vmatpush.msra.mxu0 0.0
        %1056 = vmatpush.msra.mxu0 0.0
        %1057 = vmatpush.msra.mxu0 0.0
        %1058 = vmatpush.msra.mxu0 0.0
        %1059 = vmatpush.msra.mxu0 0.0
        %1060 = vmatpush.msra.mxu0 0.0
        %1061 = vmatpush.msra.mxu0 0.0
        %1062 = vmatpush.msra.mxu0 0.0
        %1063 = vmatpush.msra.mxu0 %v1001
        %1064 = vmatmul.f32.gmra.mxu0 %v1006
        %v1065 = vpop.f32.mrf.mxu0
        %v1066 = vadd.f32 %v404, %v1065
        %1067 = vdwg.mxu0
        %1068 = vmatpush.msra.mxu0 0.0
        %1069 = vmatpush.msra.mxu0 0.0
        %1070 = vmatpush.msra.mxu0 0.0
        %1071 = vmatpush.msra.mxu0 0.0
        %1072 = vmatpush.msra.mxu0 0.0
        %1073 = vmatpush.msra.mxu0 0.0
        %1074 = vmatpush.msra.mxu0 0.0
        %1075 = vmatpush.msra.mxu0 0.0
        %1076 = vmatpush.msra.mxu0 0.0
        %1077 = vmatpush.msra.mxu0 0.0
        %1078 = vmatpush.msra.mxu0 0.0
        %1079 = vmatpush.msra.mxu0 0.0
        %1080 = vmatpush.msra.mxu0 0.0
        %1081 = vmatpush.msra.mxu0 0.0
        %1082 = vmatpush.msra.mxu0 0.0
        %1083 = vmatpush.msra.mxu0 %v1002
        %1084 = vmatmul.f32.gmra.mxu0 %v1006
        %v1085 = vpop.f32.mrf.mxu0
        %v1086 = vadd.f32 %v439, %v1085
        %1087 = vdwg.mxu0
        %v1088 = vmax.f32 %v1026, 0.0
        %v1089 = vmax.f32 %v1046, 0.0
        %v1090 = vmax.f32 %v1066, 0.0
        %v1091 = vmax.f32 %v1086, 0.0
        %vm1092 = vcmp.ne.f32.partialorder %v1026, %v1026
        %vm1093 = vcmp.ne.f32.partialorder %v1046, %v1046
        %vm1094 = vcmp.ne.f32.partialorder %v1066, %v1066
        %vm1095 = vcmp.ne.f32.partialorder %v1086, %v1086
        %v1096 = vadd.f32 %v1026, 0.0
        %v1097 = vadd.f32 %v1046, 0.0
        %v1098 = vadd.f32 %v1066, 0.0
        %v1099 = vadd.f32 %v1086, 0.0
        %v1100 = vand.u32 2147483647, %v1026
        %v1101 = vand.u32 2147483647, %v1046
        %v1102 = vand.u32 2147483647, %v1066
        %v1103 = vand.u32 2147483647, %v1086
        %v1104 = vsub.f32 0.0, %v1100
        %v1105 = vsub.f32 0.0, %v1101
        %v1106 = vsub.f32 0.0, %v1102
        %v1107 = vsub.f32 0.0, %v1103
        %v1108 = vmul.f32 %v1104, 1.442695
        %v1109 = vpow.pop %v1108
        %v1110 = vmul.f32 %v1105, 1.442695
        %v1111 = vpow.pop %v1110
        %v1112 = vmul.f32 %v1106, 1.442695
        %v1113 = vpow.pop %v1112
        %v1114 = vmul.f32 %v1107, 1.442695
        %v1115 = vpow.pop %v1114
        %v1116 = vadd.f32 %v1109, 1.0
        %v1117 = vlog2.pop %v1116
        %v1118 = vmul.f32 %v1117, 0.6931472
        %v1119 = vmul.f32 -0.5, %v1109
        %v1120 = vadd.f32 %v1119, 1.0
        %v1121 = vmul.f32 %v1120, %v1109
        %v1122 = vand.u32 2147483647, %v1109
        %vm1123 = vcmp.lt.f32.partialorder %v1122, 0.0004427343
        %v1124 = vsel %vm1123, %v1121, %v1118
        %v1125 = vadd.f32 %v1111, 1.0
        %v1126 = vlog2.pop %v1125
        %v1127 = vmul.f32 %v1126, 0.6931472
        %v1128 = vmul.f32 -0.5, %v1111
        %v1129 = vadd.f32 %v1128, 1.0
        %v1130 = vmul.f32 %v1129, %v1111
        %v1131 = vand.u32 2147483647, %v1111
        %vm1132 = vcmp.lt.f32.partialorder %v1131, 0.0004427343
        %v1133 = vsel %vm1132, %v1130, %v1127
        %v1134 = vadd.f32 %v1113, 1.0
        %v1135 = vlog2.pop %v1134
        %v1136 = vmul.f32 %v1135, 0.6931472
        %v1137 = vmul.f32 -0.5, %v1113
        %v1138 = vadd.f32 %v1137, 1.0
        %v1139 = vmul.f32 %v1138, %v1113
        %v1140 = vand.u32 2147483647, %v1113
        %vm1141 = vcmp.lt.f32.partialorder %v1140, 0.0004427343
        %v1142 = vsel %vm1141, %v1139, %v1136
        %v1143 = vadd.f32 %v1115, 1.0
        %v1144 = vlog2.pop %v1143
        %v1145 = vmul.f32 %v1144, 0.6931472
        %v1146 = vmul.f32 -0.5, %v1115
        %v1147 = vadd.f32 %v1146, 1.0
        %v1148 = vmul.f32 %v1147, %v1115
        %v1149 = vand.u32 2147483647, %v1115
        %vm1150 = vcmp.lt.f32.partialorder %v1149, 0.0004427343
        %v1151 = vsel %vm1150, %v1148, %v1145
        %v1152 = vadd.f32 %v1088, %v1124
        %v1153 = vadd.f32 %v1089, %v1133
        %v1154 = vadd.f32 %v1090, %v1142
        %v1155 = vadd.f32 %v1091, %v1151
        %v1156 = vsel %vm1092, %v1096, %v1152
        %v1157 = vsel %vm1093, %v1097, %v1153
        %v1158 = vsel %vm1094, %v1098, %v1154
        %v1159 = vsel %vm1095, %v1099, %v1155
        %v1160 = vsub.f32 0.0, %v1156
        %v1161 = vsub.f32 0.0, %v1157
        %v1162 = vsub.f32 0.0, %v1158
        %v1163 = vsub.f32 0.0, %v1159
        %v1164 = vld [vmem:[%s4] sm:$0x1]
        %v1166 = vsel %vm521, %v1164, 0
        %1168 = vmatpush.msra.mxu0 0.0
        %1169 = vmatpush.msra.mxu0 0.0
        %1170 = vmatpush.msra.mxu0 0.0
        %1171 = vmatpush.msra.mxu0 0.0
        %1172 = vmatpush.msra.mxu0 0.0
        %1173 = vmatpush.msra.mxu0 0.0
        %1174 = vmatpush.msra.mxu0 0.0
        %1175 = vmatpush.msra.mxu0 0.0
        %1176 = vmatpush.msra.mxu0 0.0
        %1177 = vmatpush.msra.mxu0 0.0
        %1178 = vmatpush.msra.mxu0 0.0
        %1179 = vmatpush.msra.mxu0 0.0
        %1180 = vmatpush.msra.mxu0 0.0
        %1181 = vmatpush.msra.mxu0 0.0
        %1182 = vmatpush.msra.mxu0 0.0
        %1183 = vmatpush.msra.mxu0 %v1160
        %1184 = vmatmul.f32.gmra.mxu0 %v1166
        %v1185 = vpop.f32.mrf.mxu0
        %v1186 = vadd.f32 %v337, %v1185
        %1187 = vdwg.mxu0
        %1188 = vmatpush.msra.mxu0 0.0
        %1189 = vmatpush.msra.mxu0 0.0
        %1190 = vmatpush.msra.mxu0 0.0
        %1191 = vmatpush.msra.mxu0 0.0
        %1192 = vmatpush.msra.mxu0 0.0
        %1193 = vmatpush.msra.mxu0 0.0
        %1194 = vmatpush.msra.mxu0 0.0
        %1195 = vmatpush.msra.mxu0 0.0
        %1196 = vmatpush.msra.mxu0 0.0
        %1197 = vmatpush.msra.mxu0 0.0
        %1198 = vmatpush.msra.mxu0 0.0
        %1199 = vmatpush.msra.mxu0 0.0
        %1200 = vmatpush.msra.mxu0 0.0
        %1201 = vmatpush.msra.mxu0 0.0
        %1202 = vmatpush.msra.mxu0 0.0
        %1203 = vmatpush.msra.mxu0 %v1161
        %1204 = vmatmul.f32.gmra.mxu0 %v1166
        %v1205 = vpop.f32.mrf.mxu0
        %v1206 = vadd.f32 %v372, %v1205
        %1207 = vdwg.mxu0
        %1208 = vmatpush.msra.mxu0 0.0
        %1209 = vmatpush.msra.mxu0 0.0
        %1210 = vmatpush.msra.mxu0 0.0
        %1211 = vmatpush.msra.mxu0 0.0
        %1212 = vmatpush.msra.mxu0 0.0
        %1213 = vmatpush.msra.mxu0 0.0
        %1214 = vmatpush.msra.mxu0 0.0
        %1215 = vmatpush.msra.mxu0 0.0
        %1216 = vmatpush.msra.mxu0 0.0
        %1217 = vmatpush.msra.mxu0 0.0
        %1218 = vmatpush.msra.mxu0 0.0
        %1219 = vmatpush.msra.mxu0 0.0
        %1220 = vmatpush.msra.mxu0 0.0
        %1221 = vmatpush.msra.mxu0 0.0
        %1222 = vmatpush.msra.mxu0 0.0
        %1223 = vmatpush.msra.mxu0 %v1162
        %1224 = vmatmul.f32.gmra.mxu0 %v1166
        %v1225 = vpop.f32.mrf.mxu0
        %v1226 = vadd.f32 %v407, %v1225
        %1227 = vdwg.mxu0
        %1228 = vmatpush.msra.mxu0 0.0
        %1229 = vmatpush.msra.mxu0 0.0
        %1230 = vmatpush.msra.mxu0 0.0
        %1231 = vmatpush.msra.mxu0 0.0
        %1232 = vmatpush.msra.mxu0 0.0
        %1233 = vmatpush.msra.mxu0 0.0
        %1234 = vmatpush.msra.mxu0 0.0
        %1235 = vmatpush.msra.mxu0 0.0
        %1236 = vmatpush.msra.mxu0 0.0
        %1237 = vmatpush.msra.mxu0 0.0
        %1238 = vmatpush.msra.mxu0 0.0
        %1239 = vmatpush.msra.mxu0 0.0
        %1240 = vmatpush.msra.mxu0 0.0
        %1241 = vmatpush.msra.mxu0 0.0
        %1242 = vmatpush.msra.mxu0 0.0
        %1243 = vmatpush.msra.mxu0 %v1163
        %1244 = vmatmul.f32.gmra.mxu0 %v1166
        %v1245 = vpop.f32.mrf.mxu0
        %v1246 = vadd.f32 %v442, %v1245
        %1247 = vdwg.mxu0
        %v1248 = vmax.f32 %v1186, 0.0
        %v1249 = vmax.f32 %v1206, 0.0
        %v1250 = vmax.f32 %v1226, 0.0
        %v1251 = vmax.f32 %v1246, 0.0
        %vm1252 = vcmp.ne.f32.partialorder %v1186, %v1186
        %vm1253 = vcmp.ne.f32.partialorder %v1206, %v1206
        %vm1254 = vcmp.ne.f32.partialorder %v1226, %v1226
        %vm1255 = vcmp.ne.f32.partialorder %v1246, %v1246
        %v1256 = vadd.f32 %v1186, 0.0
        %v1257 = vadd.f32 %v1206, 0.0
        %v1258 = vadd.f32 %v1226, 0.0
        %v1259 = vadd.f32 %v1246, 0.0
        %v1260 = vand.u32 2147483647, %v1186
        %v1261 = vand.u32 2147483647, %v1206
        %v1262 = vand.u32 2147483647, %v1226
        %v1263 = vand.u32 2147483647, %v1246
        %v1264 = vsub.f32 0.0, %v1260
        %v1265 = vsub.f32 0.0, %v1261
        %v1266 = vsub.f32 0.0, %v1262
        %v1267 = vsub.f32 0.0, %v1263
        %v1268 = vmul.f32 %v1264, 1.442695
        %v1269 = vpow.pop %v1268
        %v1270 = vmul.f32 %v1265, 1.442695
        %v1271 = vpow.pop %v1270
        %v1272 = vmul.f32 %v1266, 1.442695
        %v1273 = vpow.pop %v1272
        %v1274 = vmul.f32 %v1267, 1.442695
        %v1275 = vpow.pop %v1274
        %v1276 = vadd.f32 %v1269, 1.0
        %v1277 = vlog2.pop %v1276
        %v1278 = vmul.f32 %v1277, 0.6931472
        %v1279 = vmul.f32 -0.5, %v1269
        %v1280 = vadd.f32 %v1279, 1.0
        %v1281 = vmul.f32 %v1280, %v1269
        %v1282 = vand.u32 2147483647, %v1269
        %vm1283 = vcmp.lt.f32.partialorder %v1282, 0.0004427343
        %v1284 = vsel %vm1283, %v1281, %v1278
        %v1285 = vadd.f32 %v1271, 1.0
        %v1286 = vlog2.pop %v1285
        %v1287 = vmul.f32 %v1286, 0.6931472
        %v1288 = vmul.f32 -0.5, %v1271
        %v1289 = vadd.f32 %v1288, 1.0
        %v1290 = vmul.f32 %v1289, %v1271
        %v1291 = vand.u32 2147483647, %v1271
        %vm1292 = vcmp.lt.f32.partialorder %v1291, 0.0004427343
        %v1293 = vsel %vm1292, %v1290, %v1287
        %v1294 = vadd.f32 %v1273, 1.0
        %v1295 = vlog2.pop %v1294
        %v1296 = vmul.f32 %v1295, 0.6931472
        %v1297 = vmul.f32 -0.5, %v1273
        %v1298 = vadd.f32 %v1297, 1.0
        %v1299 = vmul.f32 %v1298, %v1273
        %v1300 = vand.u32 2147483647, %v1273
        %vm1301 = vcmp.lt.f32.partialorder %v1300, 0.0004427343
        %v1302 = vsel %vm1301, %v1299, %v1296
        %v1303 = vadd.f32 %v1275, 1.0
        %v1304 = vlog2.pop %v1303
        %v1305 = vmul.f32 %v1304, 0.6931472
        %v1306 = vmul.f32 -0.5, %v1275
        %v1307 = vadd.f32 %v1306, 1.0
        %v1308 = vmul.f32 %v1307, %v1275
        %v1309 = vand.u32 2147483647, %v1275
        %vm1310 = vcmp.lt.f32.partialorder %v1309, 0.0004427343
        %v1311 = vsel %vm1310, %v1308, %v1305
        %v1312 = vadd.f32 %v1248, %v1284
        %v1313 = vadd.f32 %v1249, %v1293
        %v1314 = vadd.f32 %v1250, %v1302
        %v1315 = vadd.f32 %v1251, %v1311
        %v1316 = vsel %vm1252, %v1256, %v1312
        %v1317 = vsel %vm1253, %v1257, %v1313
        %v1318 = vsel %vm1254, %v1258, %v1314
        %v1319 = vsel %vm1255, %v1259, %v1315
        %v1320 = vsub.f32 0.0, %v1316
        %v1321 = vsub.f32 0.0, %v1317
        %v1322 = vsub.f32 0.0, %v1318
        %v1323 = vsub.f32 0.0, %v1319
        %v1328 = vrot.slane %v1321, 7
        %v1329 = vrot.slane %v1322, 6
        %v1330 = vrot.slane %v1323, 5
        %vm1331 = vcmask 1040384
        %v1332 = vsel %vm1331, %v1320, %v1328
        %vm1333 = vcmask 1042434
        %v1334 = vsel %vm1333, %v1329, %v1330
        %vm1335 = vcmask 1041408
        %v1336 = vsel %vm1335, %v1332, %v1334
        %v1338 = vlaneseq
        %vm1339 = vcmp.ge.s32.totalorder %v1338, 0
        %vm1340 = vcmp.lt.s32.totalorder %v1338, 512
        %vm1341 = vmand %vm1339, %vm1340
        %1342 = vst.msk [vmem:[%s218] sm:$0xf] %vm1341, %v1336
        %s1343 = sand.u32 %s137, 1
        %s1344 = scalar_lea.sflag [#allocation3], %s1343
        %s1345 = sand.u32 %s137, 1
        %s1346 = smul.addr %s1345, 4
        %s1347 = scalar_lea.vmem [#allocation2], %s1346
        // Predicated region
        $region41: #{tpu_custom_call.1} parent=39 // pred_check
          %p1348 = pneg %p147
        $region42: #{tpu_custom_call.1} parent=39 // pred_check_branch
          %1350 = sbr.rel (%p1348) target = $region44
        $region43: #{tpu_custom_call.1} parent=39 // pred_region
          %s1351 = smul.u32 4, %s19
          %1353 = vsyncadd %s1344, 0
          %s1354 = scalar_lea.hbm %s5, %s1351
          %s1356 = sshll.u32 %s1347, 4
          %s1357 = int_to_ptr.vmem [resolvable:$true] %s1356
          %s1358 = sshll.u32 %s1354, 4
          %s1359 = int_to_ptr.hbm [resolvable:$true] %s1358
          %1361 = dma.vmem_to_hbm [thread:$0]  %s1357, 64, %s1359, %s1344
        $region44: #{tpu_custom_call.1} parent=39 // pred_fallthru
          _
      $region40: #{tpu_custom_call.1} parent=5 // pred_fallthru
        _
      %p1362 = scmp.le.s32.totalorder 2, %s14
      // Predicated region
      $region45: #{tpu_custom_call.1} parent=5 // pred_check
        %p1363 = pneg %p1362
      $region46: #{tpu_custom_call.1} parent=5 // pred_check_branch
        %1365 = sbr.rel (%p1363) target = $region48
      $region47: #{tpu_custom_call.1} parent=5 // pred_region
        %s1366 = ssub.s32 %s14, 2
        // Predicated region
        $region49: #{tpu_custom_call.1} parent=47 // pred_check
          %p1367 = pneg %p153
        $region50: #{tpu_custom_call.1} parent=47 // pred_check_branch
          %1369 = sbr.rel (%p1367) target = $region52
        $region51: #{tpu_custom_call.1} parent=47 // pred_region
          %s1370 = sand.u32 %s138, 1
          %s1371 = scalar_lea.sflag [#allocation3], %s1370
          %s1372 = sand.u32 %s138, 1
          %s1373 = smul.addr %s1372, 4
          %s1374 = scalar_lea.vmem [#allocation2], %s1373
          %1376 = dma.done %s1371, 64
        $region52: #{tpu_custom_call.1} parent=47 // pred_fallthru
          _
      $region48: #{tpu_custom_call.1} parent=5 // pred_fallthru
        _
    $region6: #{tpu_custom_call.1} parent=1 // loop_footer
      %s18 = sadd.s32 1, %s14
    $region7: #{tpu_custom_call.1} parent=1 // loop_footer_branch
      %13 = sbr.rel target = $region3
    $region8: #{tpu_custom_call.1} parent=1 // loop_exit
      _
    %1377 = vsyncpa [#allocation3], 1
    %s1378 = scalar_lea.sflag [#allocation3], 1
    %1379 = vsyncpa %s1378, 1

</llo_original>
